<compile_context>
chip_gen: v7x
topology: tpu7x:2x2x1
jax: 0.10.0
libtpu: 0.0.40
codegen_flags: <defaults>
</compile_context>

<pallas_src>
import functools
import math

import jax
import jax.numpy as jnp
import numpy as np
from jax import lax
from jax.experimental import pallas as pl
from jax.experimental.pallas import tpu as pltpu


def _round_up(v, m):
    return ((v + m - 1) // m) * m


def _choose_tile_i(I, H, bm):
    """Largest tile of the intermediate dim whose fp8 weight tiles fit the budget."""
    budget = 20 * 1024 * 1024            # fp8 bytes per pipeline buffer (w1+w3+w2 tiles)
    if 3 * I * H <= budget:
        return I
    q = (128 * bm) // math.gcd(128, bm)  # lane-aligned and scale-block aligned
    ti = max(q, ((budget // (3 * H)) // q) * q)
    while ti > q and I % ti != 0:
        ti -= q
    return ti if (ti > 0 and I % ti == 0) else I


def prepare_fp8_moe_scales(w13_scale, w2_scale, block_size, inter_size, hidden_size):
    """One-time (weight-load) prep: lane-expand block scales to bf16 and pre-block the
    w13 scale so each (expert, I-tile) maps to a whole BlockSpec block."""
    bm, bn = block_size
    E = w13_scale.shape[0]
    tI = _choose_tile_i(inter_size, hidden_size, bm)
    nI = inter_size // tI
    spt = tI // bm
    # expand along the lane (input) dim only; the sublane repeat happens in-kernel.
    s13 = jnp.repeat(w13_scale.astype(jnp.bfloat16), bn, axis=2)      # [E, 2I/bm, H]
    s13 = s13.reshape(E, 2 * nI, spt, hidden_size)                    # [E, 2nI, spt, H]
    s2 = jnp.repeat(w2_scale.astype(jnp.bfloat16), bn, axis=2)        # [E, H/bm, I]
    return s13, s2, tI


# ----------------------------------------------------------------------------
# Pallas kernel. Grid = (token_tiles, experts, I_tiles); token axis is "parallel"
# (megacore on v7x), expert and I axes are "arbitrary" reductions into a f32
# VMEM accumulator; the bf16 output tile is written on the last reduction step.
# ----------------------------------------------------------------------------
def _moe_kernel(active_ref, fetch_ref,                       # scalar prefetch (SMEM)
                ids_ref, wts_ref, x_ref,
                w1_ref, w3_ref, w2_ref, s1_ref, s3_ref, s2_ref,
                out_ref, acc_ref, *, experts_min, bm):
    t = pl.program_id(0)
    e = pl.program_id(1)
    i = pl.program_id(2)

    @pl.when(jnp.logical_and(e == 0, i == 0))
    def _init():
        acc_ref[...] = jnp.zeros_like(acc_ref)

    # Skip all compute for experts with no routed tokens in this token tile.
    @pl.when(active_ref[t, e] > 0)
    def _compute():
        ids = ids_ref[...]                                   # [tT, K] int32
        wts = wts_ref[...].astype(jnp.float32)               # [tT, K]
        gate = jnp.sum(jnp.where(ids == experts_min + e, wts, 0.0),
                       axis=1, keepdims=True)                # [tT, 1]

        x = x_ref[...]                                       # [tT, H] bf16

        # In-kernel block-FP8 dequant: fp8 -> bf16, times lane-expanded bf16 scale
        # (sublane repeat by the quant block height).
        w1 = w1_ref[...].astype(jnp.bfloat16) * jnp.repeat(s1_ref[...], bm, axis=0)
        w3 = w3_ref[...].astype(jnp.bfloat16) * jnp.repeat(s3_ref[...], bm, axis=0)
        w2 = w2_ref[...].astype(jnp.bfloat16) * jnp.repeat(s2_ref[...], bm, axis=0)

        # permuted_weights=True => weights are [out, in]; contract last dims (trans_b).
        dn = (((1,), (1,)), ((), ()))
        g = lax.dot_general(x, w1, dn, preferred_element_type=jnp.float32)   # [tT, tI]
        u = lax.dot_general(x, w3, dn, preferred_element_type=jnp.float32)   # [tT, tI]
        h = g * pl.reciprocal(1.0 + jnp.exp(-g), approx=True) * u            # silu(g)*u
        hw = (h * gate).astype(jnp.bfloat16)       # fold router weight here (linear)
        acc_ref[...] += lax.dot_general(hw, w2, dn,
                                        preferred_element_type=jnp.float32)  # [tT, H]

    @pl.when(jnp.logical_and(e == pl.num_programs(1) - 1,
                             i == pl.num_programs(2) - 1))
    def _finalize():
        out_ref[...] = acc_ref[...].astype(out_ref.dtype)


def mixture_of_experts_fp8_pallas(x, topk_ids, topk_weights,
                                  w13_fp8, w2_fp8, s13_blocks, s2_exp,
                                  *, tile_i, block_size, experts_min, experts_max,
                                  activation="silu"):
    assert activation == "silu"
    bm, bn = block_size
    T, H = x.shape
    K = topk_ids.shape[1]
    E, two_i, H2 = w13_fp8.shape
    assert H2 == H
    I = two_i // 2
    assert w2_fp8.shape == (E, H, I)
    assert E == experts_max - experts_min + 1
    assert I % bm == 0 and H % bn == 0 and H % bm == 0 and I % bn == 0

    tI = tile_i
    assert I % tI == 0 and tI % bm == 0
    nI = I // tI
    spt = tI // bm
    assert s13_blocks.shape == (E, 2 * nI, spt, H)
    assert s2_exp.shape == (E, H // bm, I)

    # ---- token tiling (leading "parallel" grid axis; bounds acc/x VMEM) -----
    tT = min(256, _round_up(T, 8))
    T_pad = _round_up(T, tT)
    nT = T_pad // tT
    if T_pad != T:
        x = jnp.pad(x, ((0, T_pad - T), (0, 0)))
        topk_ids = jnp.pad(topk_ids, ((0, T_pad - T), (0, 0)), constant_values=-1)
        topk_weights = jnp.pad(topk_weights, ((0, T_pad - T), (0, 0)))

    # ---- routing metadata, scalar-prefetched into SMEM ----------------------
    eids = experts_min + jnp.arange(E, dtype=jnp.int32)
    hits = topk_ids.reshape(nT, tT, K)[..., None] == eids                  # [nT,tT,K,E]
    active = jnp.any(hits, axis=(1, 2)).astype(jnp.int32)                  # [nT, E]
    last_active = jnp.where(active > 0,
                            jnp.arange(E, dtype=jnp.int32)[None, :], -1)
    fetch = jnp.maximum(lax.cummax(last_active, axis=1), 0).astype(jnp.int32)

    # For inactive experts keep the previously fetched weight block index so Pallas
    # issues no weight DMA at all for them.
    def sel(i, a):
        return jnp.where(a > 0, i, nI - 1)

    in_specs = [
        pl.BlockSpec((tT, K), lambda t, e, i, a, f: (t, 0)),               # topk_ids
        pl.BlockSpec((tT, K), lambda t, e, i, a, f: (t, 0)),               # topk_weights
        pl.BlockSpec((tT, H), lambda t, e, i, a, f: (t, 0)),               # x
        pl.BlockSpec((None, tI, H),                                        # w1 tile
                     lambda t, e, i, a, f: (f[t, e], sel(i, a[t, e]), 0)),
        pl.BlockSpec((None, tI, H),                                        # w3 tile
                     lambda t, e, i, a, f: (f[t, e], sel(i, a[t, e]) + nI, 0)),
        pl.BlockSpec((None, H, tI),                                        # w2 tile
                     lambda t, e, i, a, f: (f[t, e], 0, sel(i, a[t, e]))),
        pl.BlockSpec((None, None, spt, H),                                 # w1 scale
                     lambda t, e, i, a, f: (f[t, e], sel(i, a[t, e]), 0, 0)),
        pl.BlockSpec((None, None, spt, H),                                 # w3 scale
                     lambda t, e, i, a, f: (f[t, e], sel(i, a[t, e]) + nI, 0, 0)),
        pl.BlockSpec((None, H // bm, tI),                                  # w2 scale
                     lambda t, e, i, a, f: (f[t, e], 0, sel(i, a[t, e]))),
    ]
    out_specs = pl.BlockSpec((tT, H), lambda t, e, i, a, f: (t, 0))

    # Explicit VMEM budget (double-buffered inputs + f32 accumulator + headroom).
    per_buf = (2 * tI * H + H * tI                         # fp8 w1 + w3 + w2
               + 2 * spt * H * 2 + (H // bm) * tI * 2      # bf16 scales
               + tT * H * 2 + 2 * tT * K * 4               # x + ids + wts
               + tT * H * 2)                               # out
    vmem_limit = int(min(112 * 1024 * 1024,
                         max(32 * 1024 * 1024,
                             3 * per_buf + tT * H * 4 + (2 << 20))))

    out = pl.pallas_call(
        functools.partial(_moe_kernel, experts_min=experts_min, bm=bm),
        out_shape=jax.ShapeDtypeStruct((T_pad, H), x.dtype),
        grid_spec=pltpu.PrefetchScalarGridSpec(
            num_scalar_prefetch=2,
            grid=(nT, E, nI),
            in_specs=in_specs,
            out_specs=out_specs,
            scratch_shapes=[pltpu.VMEM((tT, H), jnp.float32)],
        ),
        compiler_params=pltpu.CompilerParams(
            dimension_semantics=("parallel", "arbitrary", "arbitrary"),
            vmem_limit_bytes=vmem_limit),
    )(active, fetch, topk_ids, topk_weights, x,
      w13_fp8, w13_fp8, w2_fp8, s13_blocks, s13_blocks, s2_exp)
    return out[:T]


# ----------------------------------------------------------------------------
# Block-FP8 dequantization (mirrors dequant_block_fp8_weight_naive, 3-D branch).
# Used only for the pure-JAX correctness reference; the kernel dequantizes on-chip.
# ----------------------------------------------------------------------------
def dequant_block_fp8_weight(weight_fp8, scale_inv, block_size, dtype=jnp.bfloat16):
    bm, bn = block_size
    E, M, N = weight_fp8.shape
    sm, sn = scale_inv.shape[-2], scale_inv.shape[-1]
    assert sm * bm == M and sn * bn == N
    w = weight_fp8.astype(dtype).reshape(E, sm, bm, sn, bn)
    s = scale_inv.astype(dtype).reshape(E, sm, 1, sn, 1)
    return (w * s).reshape(E, M, N)


# ----------------------------------------------------------------------------
# Module-equivalent wrapper
# ----------------------------------------------------------------------------
class VllmMixtureOfExpertsOpFP8:
    def __init__(self, num_experts, experts_min=0, experts_max=8,
                 block_size=(16, 16)):
        self.num_experts = num_experts
        self.experts_min = experts_min
        self.experts_max = experts_max
        self.block_size = block_size
        # moe_n_slice == 1 for num_experts <= 32; the per-slice sum is algebraically
        # identical to a single call anyway.
        self.moe_n_slice = 1

    def set_weights(self, w13_fp8, w13_scale, w2_fp8, w2_scale):
        self.w13_fp8 = w13_fp8
        self.w2_fp8 = w2_fp8
        E, two_i, H = w13_fp8.shape
        I = two_i // 2
        # One-time weight-load prep (scale lane-expansion + blocking, ~2/bm of the
        # fp8 weight bytes); fp8 weights themselves stay untouched in HBM.
        self.s13_blocks, self.s2_exp, self.tile_i = prepare_fp8_moe_scales(
            w13_scale, w2_scale, self.block_size, I, H)

    def __call__(self, x, topk_ids, topk_weights, permuted_weights=True,
                 activation="silu"):
        assert permuted_weights, "kernel assumes [out, in] ('permuted') weights"
        return mixture_of_experts_fp8_pallas(
            x, topk_ids, topk_weights,
            self.w13_fp8, self.w2_fp8, self.s13_blocks, self.s2_exp,
            tile_i=self.tile_i, block_size=self.block_size,
            experts_min=self.experts_min, experts_max=self.experts_max,
            activation=activation)


# ----------------------------------------------------------------------------
# Pure-JAX reference (f32) for a correctness check
# ----------------------------------------------------------------------------
def _moe_ref(x, ids, wts, w13, w2, experts_min):
    xf = x.astype(jnp.float32)
    E = w13.shape[0]
    I = w13.shape[1] // 2
    out = jnp.zeros(x.shape, jnp.float32)
    for e in range(E):
        eg = experts_min + e
        gw = jnp.sum(jnp.where(ids == eg, wts.astype(jnp.float32), 0.0), axis=1)
        g = xf @ w13[e, :I].astype(jnp.float32).T
        u = xf @ w13[e, I:].astype(jnp.float32).T
        h = (g * jax.nn.sigmoid(g)) * u
        out = out + gw[:, None] * (h @ w2[e].astype(jnp.float32).T)
    return out


if __name__ == "__main__":
    # Small shapes: 4 experts, 8 tokens, hidden=32, intermediate=64, top-2.
    E, T, H, I, K = 4, 8, 32, 64, 2
    EXPERTS_MIN, EXPERTS_MAX = 0, 3
    BLOCK = (16, 16)   # fp8 quantization block size (module default 128 is too
                       # large for these toy shapes; block size is configurable)

    key = jax.random.PRNGKey(0)
    k1, k2, k3, k4, k5, k6, k7 = jax.random.split(key, 7)

    # FP8 block-quantized expert weights + inverse scales (deterministic).
    w13_fp8 = jax.random.normal(k1, (E, 2 * I, H), jnp.float32).astype(
        jnp.float8_e4m3fn)
    w2_fp8 = jax.random.normal(k2, (E, H, I), jnp.float32).astype(
        jnp.float8_e4m3fn)
    w13_scale = jax.random.uniform(k3, (E, 2 * I // BLOCK[0], H // BLOCK[1]),
                                   jnp.float32, 0.5, 1.5)
    w2_scale = jax.random.uniform(k4, (E, H // BLOCK[0], I // BLOCK[1]),
                                  jnp.float32, 0.5, 1.5)

    # Activations and routing.
    x = jax.random.normal(k5, (T, H), jnp.float32).astype(jnp.bfloat16)
    topk_ids = jax.random.randint(k6, (T, K), 0, E, jnp.int32)
    raw = jax.random.uniform(k7, (T, K), jnp.float32, 0.1, 1.0)
    topk_weights = raw / jnp.sum(raw, axis=1, keepdims=True)

    moe = VllmMixtureOfExpertsOpFP8(E, EXPERTS_MIN, EXPERTS_MAX, BLOCK)
    moe.set_weights(w13_fp8, w13_scale, w2_fp8, w2_scale)

    out = moe(x, topk_ids, topk_weights, permuted_weights=True,
              activation="silu")
    out = jax.block_until_ready(out)
    assert out.shape == (T, H) and out.dtype == jnp.bfloat16

    # Correctness check vs. f32 reference on the dequantized bf16 weights.
    w13_dq = dequant_block_fp8_weight(w13_fp8, w13_scale, BLOCK)
    w2_dq = dequant_block_fp8_weight(w2_fp8, w2_scale, BLOCK)
    ref = _moe_ref(x, topk_ids, topk_weights, w13_dq, w2_dq, EXPERTS_MIN)
    np.testing.assert_allclose(np.asarray(out, np.float32), np.asarray(ref),
                               rtol=1e-1, atol=5e-1)

    print("KERNEL_OK")
</pallas_src>

<mosaic_0001>
module attributes {stable_mosaic.version = 11 : i64} {
  func.func @_moe_kernel(%arg0: i32, %arg1: i32, %arg2: i32, %arg3: memref<1x4xi32, #tpu.memory_space<smem>>, %arg4: memref<1x4xi32, #tpu.memory_space<smem>>, %arg5: memref<8x2xi32, #tpu.memory_space<vmem>>, %arg6: memref<8x2xf32, #tpu.memory_space<vmem>>, %arg7: memref<8x32xbf16, #tpu.memory_space<vmem>>, %arg8: memref<1x64x32xf8E4M3FN, #tpu.memory_space<vmem>>, %arg9: memref<1x64x32xf8E4M3FN, #tpu.memory_space<vmem>>, %arg10: memref<1x32x64xf8E4M3FN, #tpu.memory_space<vmem>>, %arg11: memref<1x1x4x32xbf16, #tpu.memory_space<vmem>>, %arg12: memref<1x1x4x32xbf16, #tpu.memory_space<vmem>>, %arg13: memref<1x2x64xbf16, #tpu.memory_space<vmem>>, %arg14: memref<8x32xbf16, #tpu.memory_space<vmem>>, %arg15: memref<8x32xf32, #tpu.memory_space<vmem>>) attributes {dimension_semantics = [#tpu.dimension_semantics<parallel>, #tpu.dimension_semantics<arbitrary>, #tpu.dimension_semantics<arbitrary>], iteration_bounds = array<i64: 1, 4, 1>, scalar_prefetch = 2 : i64, scratch_operands = 1 : i64, tpu.core_type = #tpu.core_type<tc>, window_params = [{transform_indices = @transform_0, window_bounds = array<i64: 8, 2>}, {transform_indices = @transform_1, window_bounds = array<i64: 8, 2>}, {transform_indices = @transform_2, window_bounds = array<i64: 8, 32>}, {transform_indices = @transform_3, window_bounds = array<i64: 1, 64, 32>}, {transform_indices = @transform_4, window_bounds = array<i64: 1, 64, 32>}, {transform_indices = @transform_5, window_bounds = array<i64: 1, 32, 64>}, {transform_indices = @transform_6, window_bounds = array<i64: 1, 1, 4, 32>}, {transform_indices = @transform_7, window_bounds = array<i64: 1, 1, 4, 32>}, {transform_indices = @transform_8, window_bounds = array<i64: 1, 2, 64>}, {transform_indices = @transform_9, window_bounds = array<i64: 8, 32>}]} {
    %c0_i32 = arith.constant 0 : i32
    %0 = arith.cmpi eq, %arg1, %c0_i32 : i32
    %c0_i32_0 = arith.constant 0 : i32
    %1 = arith.cmpi eq, %arg2, %c0_i32_0 : i32
    %2 = arith.andi %0, %1 : i1
    %3 = arith.extui %2 : i1 to i32
    %c0_i32_1 = arith.constant 0 : i32
    %4 = arith.cmpi ne, %3, %c0_i32_1 : i32
    scf.if %4 {
      %cst = arith.constant 0.000000e+00 : f32
      %16 = vector.broadcast %cst : f32 to vector<8x32xf32>
      %c0 = arith.constant 0 : index
      %c0_6 = arith.constant 0 : index
      %17 = vector.load %arg15[%c0, %c0_6] : memref<8x32xf32, #tpu.memory_space<vmem>>, vector<8x32xf32>
      tpu.vector_store %arg15[%c0, %c0_6], %16 {strides = array<i32>} : memref<8x32xf32, #tpu.memory_space<vmem>>, vector<8x32xf32>,
    } else {
    }
    %5 = arith.index_cast %arg0 : i32 to index
    %6 = arith.index_cast %arg1 : i32 to index
    %7 = memref.load %arg3[%5, %6] : memref<1x4xi32, #tpu.memory_space<smem>>
    %c0_i32_2 = arith.constant 0 : i32
    %8 = arith.cmpi sgt, %7, %c0_i32_2 : i32
    %9 = arith.extui %8 : i1 to i32
    %c0_i32_3 = arith.constant 0 : i32
    %10 = arith.cmpi ne, %9, %c0_i32_3 : i32
    scf.if %10 {
      %c0 = arith.constant 0 : index
      %c0_6 = arith.constant 0 : index
      %16 = vector.load %arg5[%c0, %c0_6] : memref<8x2xi32, #tpu.memory_space<vmem>>, vector<8x2xi32>
      %c0_7 = arith.constant 0 : index
      %c0_8 = arith.constant 0 : index
      %17 = vector.load %arg6[%c0_7, %c0_8] : memref<8x2xf32, #tpu.memory_space<vmem>>, vector<8x2xf32>
      %c0_i32_9 = arith.constant 0 : i32
      %18 = arith.addi %c0_i32_9, %arg1 : i32
      %19 = vector.broadcast %18 : i32 to vector<8x2xi32>
      %20 = arith.cmpi eq, %16, %19 : vector<8x2xi32>
      %cst = arith.constant 0.000000e+00 : f32
      %21 = vector.broadcast %cst : f32 to vector<8x2xf32>
      %22 = arith.select %20, %17, %21 : vector<8x2xi1>, vector<8x2xf32>
      %cst_10 = arith.constant dense<0.000000e+00> : vector<8xf32>
      %23 = vector.multi_reduction <add>, %22, %cst_10 [1] : vector<8x2xf32> to vector<8xf32>
      %24 = vector.shape_cast %23 : vector<8xf32> to vector<8x1xf32>
      %c0_11 = arith.constant 0 : index
      %c0_12 = arith.constant 0 : index
      %25 = vector.load %arg7[%c0_11, %c0_12] : memref<8x32xbf16, #tpu.memory_space<vmem>>, vector<8x32xbf16>
      %c0_13 = arith.constant 0 : index
      %c0_14 = arith.constant 0 : index
      %c0_15 = arith.constant 0 : index
      %26 = vector.load %arg8[%c0_13, %c0_14, %c0_15] : memref<1x64x32xf8E4M3FN, #tpu.memory_space<vmem>>, vector<1x64x32xf8E4M3FN>
      %27 = vector.shape_cast %26 : vector<1x64x32xf8E4M3FN> to vector<64x32xf8E4M3FN>
      %28 = arith.extf %27 : vector<64x32xf8E4M3FN> to vector<64x32xbf16>
      %c0_16 = arith.constant 0 : index
      %c0_17 = arith.constant 0 : index
      %c0_18 = arith.constant 0 : index
      %c0_19 = arith.constant 0 : index
      %29 = vector.load %arg11[%c0_16, %c0_17, %c0_18, %c0_19] : memref<1x1x4x32xbf16, #tpu.memory_space<vmem>>, vector<1x1x4x32xbf16>
      %30 = vector.shape_cast %29 : vector<1x1x4x32xbf16> to vector<4x32xbf16>
      %31 = vector.shape_cast %30 : vector<4x32xbf16> to vector<4x1x32xbf16>
      %32 = vector.broadcast %31 : vector<4x1x32xbf16> to vector<4x16x32xbf16>
      %33 = vector.shape_cast %32 : vector<4x16x32xbf16> to vector<64x32xbf16>
      %34 = arith.mulf %28, %33 : vector<64x32xbf16>
      %c0_20 = arith.constant 0 : index
      %c0_21 = arith.constant 0 : index
      %c0_22 = arith.constant 0 : index
      %35 = vector.load %arg9[%c0_20, %c0_21, %c0_22] : memref<1x64x32xf8E4M3FN, #tpu.memory_space<vmem>>, vector<1x64x32xf8E4M3FN>
      %36 = vector.shape_cast %35 : vector<1x64x32xf8E4M3FN> to vector<64x32xf8E4M3FN>
      %37 = arith.extf %36 : vector<64x32xf8E4M3FN> to vector<64x32xbf16>
      %c0_23 = arith.constant 0 : index
      %c0_24 = arith.constant 0 : index
      %c0_25 = arith.constant 0 : index
      %c0_26 = arith.constant 0 : index
      %38 = vector.load %arg12[%c0_23, %c0_24, %c0_25, %c0_26] : memref<1x1x4x32xbf16, #tpu.memory_space<vmem>>, vector<1x1x4x32xbf16>
      %39 = vector.shape_cast %38 : vector<1x1x4x32xbf16> to vector<4x32xbf16>
      %40 = vector.shape_cast %39 : vector<4x32xbf16> to vector<4x1x32xbf16>
      %41 = vector.broadcast %40 : vector<4x1x32xbf16> to vector<4x16x32xbf16>
      %42 = vector.shape_cast %41 : vector<4x16x32xbf16> to vector<64x32xbf16>
      %43 = arith.mulf %37, %42 : vector<64x32xbf16>
      %c0_27 = arith.constant 0 : index
      %c0_28 = arith.constant 0 : index
      %c0_29 = arith.constant 0 : index
      %44 = vector.load %arg10[%c0_27, %c0_28, %c0_29] : memref<1x32x64xf8E4M3FN, #tpu.memory_space<vmem>>, vector<1x32x64xf8E4M3FN>
      %45 = vector.shape_cast %44 : vector<1x32x64xf8E4M3FN> to vector<32x64xf8E4M3FN>
      %46 = arith.extf %45 : vector<32x64xf8E4M3FN> to vector<32x64xbf16>
      %c0_30 = arith.constant 0 : index
      %c0_31 = arith.constant 0 : index
      %c0_32 = arith.constant 0 : index
      %47 = vector.load %arg13[%c0_30, %c0_31, %c0_32] : memref<1x2x64xbf16, #tpu.memory_space<vmem>>, vector<1x2x64xbf16>
      %48 = vector.shape_cast %47 : vector<1x2x64xbf16> to vector<2x64xbf16>
      %49 = vector.shape_cast %48 : vector<2x64xbf16> to vector<2x1x64xbf16>
      %50 = vector.broadcast %49 : vector<2x1x64xbf16> to vector<2x16x64xbf16>
      %51 = vector.shape_cast %50 : vector<2x16x64xbf16> to vector<32x64xbf16>
      %52 = arith.mulf %46, %51 : vector<32x64xbf16>
      %cst_33 = arith.constant dense<0.000000e+00> : vector<8x64xf32>
      %53 = tpu.matmul %25, %34, %cst_33 {dimension_numbers = #tpu.dot_dimension_numbers<[1], [1], [0], [0], [0, 0, 1, 0], [], []>} : vector<8x32xbf16>, vector<64x32xbf16>, vector<8x64xf32> -> vector<8x64xf32>
      %cst_34 = arith.constant dense<0.000000e+00> : vector<8x64xf32>
      %54 = tpu.matmul %25, %43, %cst_34 {dimension_numbers = #tpu.dot_dimension_numbers<[1], [1], [0], [0], [0, 0, 1, 0], [], []>} : vector<8x32xbf16>, vector<64x32xbf16>, vector<8x64xf32> -> vector<8x64xf32>
      %cst_35 = arith.constant 0.000000e+00 : f32
      %55 = vector.broadcast %cst_35 : f32 to vector<8x64xf32>
      %56 = arith.subf %55, %53 : vector<8x64xf32>
      %57 = math.exp %56 : vector<8x64xf32>
      %cst_36 = arith.constant 1.000000e+00 : f32
      %58 = vector.broadcast %cst_36 : f32 to vector<8x64xf32>
      %59 = arith.addf %58, %57 : vector<8x64xf32>
      %60 = tpu.reciprocal %59 {approx = true} : vector<8x64xf32> -> vector<8x64xf32>
      %61 = arith.mulf %53, %60 : vector<8x64xf32>
      %62 = arith.mulf %61, %54 : vector<8x64xf32>
      %63 = vector.broadcast %24 : vector<8x1xf32> to vector<8x64xf32>
      %64 = arith.mulf %62, %63 : vector<8x64xf32>
      %65 = arith.truncf %64 : vector<8x64xf32> to vector<8x64xbf16>
      %c0_37 = arith.constant 0 : index
      %c0_38 = arith.constant 0 : index
      %66 = vector.load %arg15[%c0_37, %c0_38] : memref<8x32xf32, #tpu.memory_space<vmem>>, vector<8x32xf32>
      %cst_39 = arith.constant dense<0.000000e+00> : vector<8x32xf32>
      %67 = tpu.matmul %65, %52, %cst_39 {dimension_numbers = #tpu.dot_dimension_numbers<[1], [1], [0], [0], [0, 0, 1, 0], [], []>} : vector<8x64xbf16>, vector<32x64xbf16>, vector<8x32xf32> -> vector<8x32xf32>
      %68 = arith.addf %66, %67 : vector<8x32xf32>
      %c0_40 = arith.constant 0 : index
      %c0_41 = arith.constant 0 : index
      %69 = vector.load %arg15[%c0_40, %c0_41] : memref<8x32xf32, #tpu.memory_space<vmem>>, vector<8x32xf32>
      tpu.vector_store %arg15[%c0_40, %c0_41], %68 {strides = array<i32>} : memref<8x32xf32, #tpu.memory_space<vmem>>, vector<8x32xf32>,
    } else {
    }
    %c3_i32 = arith.constant 3 : i32
    %11 = arith.cmpi eq, %arg1, %c3_i32 : i32
    %c0_i32_4 = arith.constant 0 : i32
    %12 = arith.cmpi eq, %arg2, %c0_i32_4 : i32
    %13 = arith.andi %11, %12 : i1
    %14 = arith.extui %13 : i1 to i32
    %c0_i32_5 = arith.constant 0 : i32
    %15 = arith.cmpi ne, %14, %c0_i32_5 : i32
    scf.if %15 {
      %c0 = arith.constant 0 : index
      %c0_6 = arith.constant 0 : index
      %16 = vector.load %arg15[%c0, %c0_6] : memref<8x32xf32, #tpu.memory_space<vmem>>, vector<8x32xf32>
      %17 = arith.truncf %16 : vector<8x32xf32> to vector<8x32xbf16>
      %c0_7 = arith.constant 0 : index
      %c0_8 = arith.constant 0 : index
      %18 = vector.load %arg14[%c0_7, %c0_8] : memref<8x32xbf16, #tpu.memory_space<vmem>>, vector<8x32xbf16>
      tpu.vector_store %arg14[%c0_7, %c0_8], %17 {strides = array<i32>} : memref<8x32xbf16, #tpu.memory_space<vmem>>, vector<8x32xbf16>,
    } else {
    }
    return
  }
  func.func @transform_0(%arg0: i32, %arg1: i32, %arg2: i32, %arg3: memref<1x4xi32, #tpu.memory_space<smem>>, %arg4: memref<1x4xi32, #tpu.memory_space<smem>>) -> (i32, i32) {
    %c0_i32 = arith.constant 0 : i32
    %c0_i32_0 = arith.constant 0 : i32
    return %arg0, %c0_i32 : i32, i32
  }
  func.func @transform_1(%arg0: i32, %arg1: i32, %arg2: i32, %arg3: memref<1x4xi32, #tpu.memory_space<smem>>, %arg4: memref<1x4xi32, #tpu.memory_space<smem>>) -> (i32, i32) {
    %c0_i32 = arith.constant 0 : i32
    %c0_i32_0 = arith.constant 0 : i32
    return %arg0, %c0_i32 : i32, i32
  }
  func.func @transform_2(%arg0: i32, %arg1: i32, %arg2: i32, %arg3: memref<1x4xi32, #tpu.memory_space<smem>>, %arg4: memref<1x4xi32, #tpu.memory_space<smem>>) -> (i32, i32) {
    %c0_i32 = arith.constant 0 : i32
    %c0_i32_0 = arith.constant 0 : i32
    return %arg0, %c0_i32 : i32, i32
  }
  func.func @transform_3(%arg0: i32, %arg1: i32, %arg2: i32, %arg3: memref<1x4xi32, #tpu.memory_space<smem>>, %arg4: memref<1x4xi32, #tpu.memory_space<smem>>) -> (i32, i32, i32) {
    %0 = arith.index_cast %arg0 : i32 to index
    %1 = arith.index_cast %arg1 : i32 to index
    %2 = memref.load %arg4[%0, %1] : memref<1x4xi32, #tpu.memory_space<smem>>
    %3 = arith.index_cast %arg0 : i32 to index
    %4 = arith.index_cast %arg1 : i32 to index
    %5 = memref.load %arg3[%3, %4] : memref<1x4xi32, #tpu.memory_space<smem>>
    %c0_i32 = arith.constant 0 : i32
    %6 = arith.cmpi sgt, %5, %c0_i32 : i32
    %c0_i32_0 = arith.constant 0 : i32
    %7 = arith.select %6, %arg2, %c0_i32_0 : i32
    %c0_i32_1 = arith.constant 0 : i32
    %c0_i32_2 = arith.constant 0 : i32
    return %2, %7, %c0_i32_1 : i32, i32, i32
  }
  func.func @transform_4(%arg0: i32, %arg1: i32, %arg2: i32, %arg3: memref<1x4xi32, #tpu.memory_space<smem>>, %arg4: memref<1x4xi32, #tpu.memory_space<smem>>) -> (i32, i32, i32) {
    %0 = arith.index_cast %arg0 : i32 to index
    %1 = arith.index_cast %arg1 : i32 to index
    %2 = memref.load %arg4[%0, %1] : memref<1x4xi32, #tpu.memory_space<smem>>
    %3 = arith.index_cast %arg0 : i32 to index
    %4 = arith.index_cast %arg1 : i32 to index
    %5 = memref.load %arg3[%3, %4] : memref<1x4xi32, #tpu.memory_space<smem>>
    %c0_i32 = arith.constant 0 : i32
    %6 = arith.cmpi sgt, %5, %c0_i32 : i32
    %c0_i32_0 = arith.constant 0 : i32
    %7 = arith.select %6, %arg2, %c0_i32_0 : i32
    %c1_i32 = arith.constant 1 : i32
    %8 = arith.addi %7, %c1_i32 : i32
    %c0_i32_1 = arith.constant 0 : i32
    %c0_i32_2 = arith.constant 0 : i32
    return %2, %8, %c0_i32_1 : i32, i32, i32
  }
  func.func @transform_5(%arg0: i32, %arg1: i32, %arg2: i32, %arg3: memref<1x4xi32, #tpu.memory_space<smem>>, %arg4: memref<1x4xi32, #tpu.memory_space<smem>>) -> (i32, i32, i32) {
    %0 = arith.index_cast %arg0 : i32 to index
    %1 = arith.index_cast %arg1 : i32 to index
    %2 = memref.load %arg4[%0, %1] : memref<1x4xi32, #tpu.memory_space<smem>>
    %3 = arith.index_cast %arg0 : i32 to index
    %4 = arith.index_cast %arg1 : i32 to index
    %5 = memref.load %arg3[%3, %4] : memref<1x4xi32, #tpu.memory_space<smem>>
    %c0_i32 = arith.constant 0 : i32
    %6 = arith.cmpi sgt, %5, %c0_i32 : i32
    %c0_i32_0 = arith.constant 0 : i32
    %7 = arith.select %6, %arg2, %c0_i32_0 : i32
    %c0_i32_1 = arith.constant 0 : i32
    %c0_i32_2 = arith.constant 0 : i32
    return %2, %c0_i32_1, %7 : i32, i32, i32
  }
  func.func @transform_6(%arg0: i32, %arg1: i32, %arg2: i32, %arg3: memref<1x4xi32, #tpu.memory_space<smem>>, %arg4: memref<1x4xi32, #tpu.memory_space<smem>>) -> (i32, i32, i32, i32) {
    %0 = arith.index_cast %arg0 : i32 to index
    %1 = arith.index_cast %arg1 : i32 to index
    %2 = memref.load %arg4[%0, %1] : memref<1x4xi32, #tpu.memory_space<smem>>
    %3 = arith.index_cast %arg0 : i32 to index
    %4 = arith.index_cast %arg1 : i32 to index
    %5 = memref.load %arg3[%3, %4] : memref<1x4xi32, #tpu.memory_space<smem>>
    %c0_i32 = arith.constant 0 : i32
    %6 = arith.cmpi sgt, %5, %c0_i32 : i32
    %c0_i32_0 = arith.constant 0 : i32
    %7 = arith.select %6, %arg2, %c0_i32_0 : i32
    %c0_i32_1 = arith.constant 0 : i32
    %c0_i32_2 = arith.constant 0 : i32
    %c0_i32_3 = arith.constant 0 : i32
    return %2, %7, %c0_i32_1, %c0_i32_2 : i32, i32, i32, i32
  }
  func.func @transform_7(%arg0: i32, %arg1: i32, %arg2: i32, %arg3: memref<1x4xi32, #tpu.memory_space<smem>>, %arg4: memref<1x4xi32, #tpu.memory_space<smem>>) -> (i32, i32, i32, i32) {
    %0 = arith.index_cast %arg0 : i32 to index
    %1 = arith.index_cast %arg1 : i32 to index
    %2 = memref.load %arg4[%0, %1] : memref<1x4xi32, #tpu.memory_space<smem>>
    %3 = arith.index_cast %arg0 : i32 to index
    %4 = arith.index_cast %arg1 : i32 to index
    %5 = memref.load %arg3[%3, %4] : memref<1x4xi32, #tpu.memory_space<smem>>
    %c0_i32 = arith.constant 0 : i32
    %6 = arith.cmpi sgt, %5, %c0_i32 : i32
    %c0_i32_0 = arith.constant 0 : i32
    %7 = arith.select %6, %arg2, %c0_i32_0 : i32
    %c1_i32 = arith.constant 1 : i32
    %8 = arith.addi %7, %c1_i32 : i32
    %c0_i32_1 = arith.constant 0 : i32
    %c0_i32_2 = arith.constant 0 : i32
    %c0_i32_3 = arith.constant 0 : i32
    return %2, %8, %c0_i32_1, %c0_i32_2 : i32, i32, i32, i32
  }
  func.func @transform_8(%arg0: i32, %arg1: i32, %arg2: i32, %arg3: memref<1x4xi32, #tpu.memory_space<smem>>, %arg4: memref<1x4xi32, #tpu.memory_space<smem>>) -> (i32, i32, i32) {
    %0 = arith.index_cast %arg0 : i32 to index
    %1 = arith.index_cast %arg1 : i32 to index
    %2 = memref.load %arg4[%0, %1] : memref<1x4xi32, #tpu.memory_space<smem>>
    %3 = arith.index_cast %arg0 : i32 to index
    %4 = arith.index_cast %arg1 : i32 to index
    %5 = memref.load %arg3[%3, %4] : memref<1x4xi32, #tpu.memory_space<smem>>
    %c0_i32 = arith.constant 0 : i32
    %6 = arith.cmpi sgt, %5, %c0_i32 : i32
    %c0_i32_0 = arith.constant 0 : i32
    %7 = arith.select %6, %arg2, %c0_i32_0 : i32
    %c0_i32_1 = arith.constant 0 : i32
    %c0_i32_2 = arith.constant 0 : i32
    return %2, %c0_i32_1, %7 : i32, i32, i32
  }
  func.func @transform_9(%arg0: i32, %arg1: i32, %arg2: i32, %arg3: memref<1x4xi32, #tpu.memory_space<smem>>, %arg4: memref<1x4xi32, #tpu.memory_space<smem>>) -> (i32, i32) {
    %c0_i32 = arith.constant 0 : i32
    %c0_i32_0 = arith.constant 0 : i32
    return %arg0, %c0_i32 : i32, i32
  }
}

</mosaic_0001>

<llo_original>
// kernel: tpu_custom_call.1
$region0: #{tpu_custom_call.1}
  #allocation0 [shape = 'u32[]', space=smem, size = 0x4, offset = 0x4, fixed_abs, tag = 'smem constant byte address 0x4 - core index']
  #allocation1 [shape = 'u32[144,128]{1,0:T(1,128)}', space=vmem, size = 0x12000, scoped, tag = 'internal scratch']
  #allocation2 [shape = 'f32[8,32]{1,0:T(8,128)}', space=vmem, size = 0x1000, scoped, tag = 'scratch operand']
  #allocation3 [shape = 's32[1]{0}', space=sflag, size = 0x4, scoped, tag = 'scoped memory for tpu_custom_call.1']
  #allocation4 [shape = 'u8[512]{0}', space=smem, size = 0x200, scoped, tag = 'prefetched SMEM operand 0']
  #allocation5 [shape = 'u8[512]{0}', space=smem, size = 0x200, scoped, tag = 'prefetched SMEM operand 1']
  %s0 = inlined_call_operand.vmem [shape: s32[1,4], index: 0, kind: input, shape index: {}]
  %s1 = inlined_call_operand.vmem [shape: s32[1,4], index: 1, kind: input, shape index: {}]
  %s2 = inlined_call_operand.vmem [shape: s32[8,2], index: 2, kind: input, shape index: {}]
  %s3 = inlined_call_operand.vmem [shape: f32[8,2], index: 3, kind: input, shape index: {}]
  %s4 = inlined_call_operand.vmem [shape: bf16[8,32], index: 4, kind: input, shape index: {}]
  %s5 = inlined_call_operand.vmem [shape: f8e4m3fn[4,128,32], index: 5, kind: input, shape index: {}]
  %s6 = inlined_call_operand.vmem [shape: f8e4m3fn[4,128,32], index: 6, kind: input, shape index: {}]
  %s7 = inlined_call_operand.vmem [shape: f8e4m3fn[4,32,64], index: 7, kind: input, shape index: {}]
  %s8 = inlined_call_operand.vmem [shape: bf16[4,2,4,32], index: 8, kind: input, shape index: {}]
  %s9 = inlined_call_operand.vmem [shape: bf16[4,2,4,32], index: 9, kind: input, shape index: {}]
  %s10 = inlined_call_operand.vmem [shape: bf16[4,2,64], index: 10, kind: input, shape index: {}]
  %s11 = inlined_call_operand.hbm [shape: bf16[8,32], index: 11, kind: output, shape index: {}]
  %s12 = sld [smem:[#allocation0]]
  $region81: #{tpu_custom_call.1} parent=0
    _
  %s14 = ssub.s32 1, %s12
  %s15 = scalar_select 0, %s14, %s12
  %s16 = sshll.u32 %s0, 4
  %s17 = int_to_ptr.vmem [resolvable:$true] %s16
  %19 = dma.vmem_to_smem %s17, 16, [#allocation4], [#allocation3]
  %s20 = sshll.u32 %s1, 4
  %s21 = int_to_ptr.vmem [resolvable:$true] %s20
  %23 = dma.vmem_to_smem %s21, 16, [#allocation5], [#allocation3]
  %24 = dma.done [#allocation3], 32
  %25 = sfence
  $region1: #{tpu_custom_call.1} parent=0
    #allocation6 [shape = 'u8[2048]{0}', space=vmem, size = 0x800, scoped, tag = 'output window, operand 0, single buffered']
    #allocation7 [shape = 's32[2]{0}', space=sflag, size = 0x8, scoped, tag = 'scoped memory for tpu_custom_call.1']
    %26 = vsyncpa [#allocation7], 0
    loop: start=0, step=1, limit=6
    $region2: #{tpu_custom_call.1} parent=1 // loop_pre_header
      _
    $region3: #{tpu_custom_call.1} parent=1 // loop_header
      %s28 = sphi 0, %s32
      %p29 = scmp.ge.s32.totalorder %s28, 6
      %s35 = sphi 0, %s54
      %s36 = sphi 0, %s50
      %s37 = sphi 0, %s46
      %s38 = sphi 0, %s35
      %s39 = sphi 0, %s36
      %s40 = sphi 0, %s37
      %s41 = sphi 0, %s38
      %s42 = sphi 0, %s39
      %s43 = sphi 0, %s40
      %s57 = sphi 0, %s59
      %s60 = sphi 0, %s57
      %s61 = sphi 0, %s60
      %s77 = sphi 0, %s61
      %s83 = sphi 0, %s85
      %s86 = sphi 0, %s83
      %s87 = sphi 0, %s86
      %s103 = sphi 0, %s87
      %s109 = sphi 0, %s111
      %s112 = sphi 0, %s109
      %s113 = sphi 0, %s112
      %s129 = sphi 0, %s113
      %s159 = sphi 0, %s161
      %s162 = sphi 0, %s159
      %s163 = sphi 0, %s162
      %s179 = sphi 0, %s163
      %s211 = sphi 0, %s213
      %s214 = sphi 0, %s211
      %s215 = sphi 0, %s214
      %s231 = sphi 0, %s215
      %s261 = sphi 0, %s263
      %s264 = sphi 0, %s261
      %s265 = sphi 0, %s264
      %s281 = sphi 0, %s265
      %s311 = sphi 0, %s313
      %s314 = sphi 0, %s311
      %s315 = sphi 0, %s314
      %s331 = sphi 0, %s315
      %s363 = sphi 0, %s365
      %s366 = sphi 0, %s363
      %s367 = sphi 0, %s366
      %s383 = sphi 0, %s367
      %s413 = sphi 0, %s415
      %s416 = sphi 0, %s413
      %s417 = sphi 0, %s416
      %s433 = sphi 0, %s417
      %s439 = sphi 0, %s441
      %s442 = sphi 0, %s439
      %s443 = sphi 0, %s442
      %s459 = sphi 0, %s443
    $region4: #{tpu_custom_call.1} parent=1 // loop_header_branch
      %31 = sbr.rel (%p29) target = $region8
    $region5: #{tpu_custom_call.1} parent=1 // loop_body
      %s33 = ssub.s32 %s28, 1
      %s34 = ssub.s32 %s28, 2
      %s44 = sadd.s32 1, %s37
      %p45 = scmp.ge.s32.totalorder %s44, 1
      %s46 = scalar_select %p45, 0, %s44
      %s47 = sadd.s32 1, %s36
      %s48 = scalar_select %p45, %s47, %s36
      %p49 = scmp.ge.s32.totalorder %s48, 4
      %s50 = scalar_select %p49, 0, %s48
      %s51 = sadd.s32 1, %s35
      %s52 = scalar_select %p49, %s51, %s35
      %p53 = scmp.ge.s32.totalorder %s52, 1
      %s54 = scalar_select %p53, 0, %s52
      %s55 = ssub.s32 %s35, %s54
      %p56 = scmp.eq.s32.totalorder %s55, 0
      %s58 = sadd.s32 %s57, 1
      %s59 = scalar_select %p56, %s57, %s58
      %p62 = pneg %p56
      %p63 = scmp.eq.s32.totalorder %s28, 3
      %p64 = por %p62, %p63
      %p65 = scmp.ne.s32.totalorder %s57, %s60
      %p66 = scmp.eq.s32.totalorder %s28, 0
      %p67 = por %p65, %p66
      %p68 = scmp.ne.s32.totalorder %s57, %s60
      %p69 = scmp.eq.s32.totalorder %s33, 3
      %p70 = por %p68, %p69
      %p71 = scmp.ne.s32.totalorder %s60, %s61
      %p72 = scmp.eq.s32.totalorder %s33, 0
      %p73 = por %p71, %p72
      %p74 = scmp.ne.s32.totalorder %s60, %s61
      %p75 = scmp.eq.s32.totalorder %s34, 3
      %p76 = por %p74, %p75
      %p78 = scmp.ne.s32.totalorder %s61, %s77
      %p79 = scmp.eq.s32.totalorder %s34, 0
      %p80 = por %p78, %p79
      %s81 = ssub.s32 %s35, %s54
      %p82 = scmp.eq.s32.totalorder %s81, 0
      %s84 = sadd.s32 %s83, 1
      %s85 = scalar_select %p82, %s83, %s84
      %p88 = pneg %p82
      %p89 = scmp.eq.s32.totalorder %s28, 3
      %p90 = por %p88, %p89
      %p91 = scmp.ne.s32.totalorder %s83, %s86
      %p92 = scmp.eq.s32.totalorder %s28, 0
      %p93 = por %p91, %p92
      %p94 = scmp.ne.s32.totalorder %s83, %s86
      %p95 = scmp.eq.s32.totalorder %s33, 3
      %p96 = por %p94, %p95
      %p97 = scmp.ne.s32.totalorder %s86, %s87
      %p98 = scmp.eq.s32.totalorder %s33, 0
      %p99 = por %p97, %p98
      %p100 = scmp.ne.s32.totalorder %s86, %s87
      %p101 = scmp.eq.s32.totalorder %s34, 3
      %p102 = por %p100, %p101
      %p104 = scmp.ne.s32.totalorder %s87, %s103
      %p105 = scmp.eq.s32.totalorder %s34, 0
      %p106 = por %p104, %p105
      %s107 = ssub.s32 %s35, %s54
      %p108 = scmp.eq.s32.totalorder %s107, 0
      %s110 = sadd.s32 %s109, 1
      %s111 = scalar_select %p108, %s109, %s110
      %p114 = pneg %p108
      %p115 = scmp.eq.s32.totalorder %s28, 3
      %p116 = por %p114, %p115
      %p117 = scmp.ne.s32.totalorder %s109, %s112
      %p118 = scmp.eq.s32.totalorder %s28, 0
      %p119 = por %p117, %p118
      %p120 = scmp.ne.s32.totalorder %s109, %s112
      %p121 = scmp.eq.s32.totalorder %s33, 3
      %p122 = por %p120, %p121
      %p123 = scmp.ne.s32.totalorder %s112, %s113
      %p124 = scmp.eq.s32.totalorder %s33, 0
      %p125 = por %p123, %p124
      %p126 = scmp.ne.s32.totalorder %s112, %s113
      %p127 = scmp.eq.s32.totalorder %s34, 3
      %p128 = por %p126, %p127
      %p130 = scmp.ne.s32.totalorder %s113, %s129
      %p131 = scmp.eq.s32.totalorder %s34, 0
      %p132 = por %p130, %p131
      %s133 = sshra.s32 %s36, 7
      %s134 = sand.u32 %s36, 127
      %s135 = sadd.s32 %s133, %s35
      %s136 = smul.u32 %s135, 128
      %s137 = sshra.s32 %s36, 7
      %s138 = sand.u32 %s36, 127
      %s139 = sadd.s32 %s136, %s138
      %s140 = sld [smem:[#allocation5 + %s139]]
      %s141 = sld [smem:[#allocation4 + %s139]]
      %p142 = scmp.gt.s32.totalorder %s141, 0
      %s143 = scalar_select %p142, %s37, 0
      %s144 = sshra.s32 %s50, 7
      %s145 = sand.u32 %s50, 127
      %s146 = sadd.s32 %s144, %s54
      %s147 = smul.u32 %s146, 128
      %s148 = sshra.s32 %s50, 7
      %s149 = sand.u32 %s50, 127
      %s150 = sadd.s32 %s147, %s149
      %s151 = sld [smem:[#allocation5 + %s150]]
      %s152 = sld [smem:[#allocation4 + %s150]]
      %p153 = scmp.gt.s32.totalorder %s152, 0
      %s154 = scalar_select %p153, %s46, 0
      %s155 = ssub.s32 %s140, %s151
      %s156 = ssub.s32 %s143, %s154
      %s157 = sor.u32 %s155, %s156
      %p158 = scmp.eq.s32.totalorder %s157, 0
      %s160 = sadd.s32 %s159, 1
      %s161 = scalar_select %p158, %s159, %s160
      %p164 = pneg %p158
      %p165 = scmp.eq.s32.totalorder %s28, 3
      %p166 = por %p164, %p165
      %p167 = scmp.ne.s32.totalorder %s159, %s162
      %p168 = scmp.eq.s32.totalorder %s28, 0
      %p169 = por %p167, %p168
      %p170 = scmp.ne.s32.totalorder %s159, %s162
      %p171 = scmp.eq.s32.totalorder %s33, 3
      %p172 = por %p170, %p171
      %p173 = scmp.ne.s32.totalorder %s162, %s163
      %p174 = scmp.eq.s32.totalorder %s33, 0
      %p175 = por %p173, %p174
      %p176 = scmp.ne.s32.totalorder %s162, %s163
      %p177 = scmp.eq.s32.totalorder %s34, 3
      %p178 = por %p176, %p177
      %p180 = scmp.ne.s32.totalorder %s163, %s179
      %p181 = scmp.eq.s32.totalorder %s34, 0
      %p182 = por %p180, %p181
      %s183 = sshra.s32 %s36, 7
      %s184 = sand.u32 %s36, 127
      %s185 = sadd.s32 %s183, %s35
      %s186 = smul.u32 %s185, 128
      %s187 = sshra.s32 %s36, 7
      %s188 = sand.u32 %s36, 127
      %s189 = sadd.s32 %s186, %s188
      %s190 = sld [smem:[#allocation5 + %s189]]
      %s191 = sld [smem:[#allocation4 + %s189]]
      %p192 = scmp.gt.s32.totalorder %s191, 0
      %s193 = scalar_select %p192, %s37, 0
      %s194 = sadd.s32 %s193, 1
      %s195 = sshra.s32 %s50, 7
      %s196 = sand.u32 %s50, 127
      %s197 = sadd.s32 %s195, %s54
      %s198 = smul.u32 %s197, 128
      %s199 = sshra.s32 %s50, 7
      %s200 = sand.u32 %s50, 127
      %s201 = sadd.s32 %s198, %s200
      %s202 = sld [smem:[#allocation5 + %s201]]
      %s203 = sld [smem:[#allocation4 + %s201]]
      %p204 = scmp.gt.s32.totalorder %s203, 0
      %s205 = scalar_select %p204, %s46, 0
      %s206 = sadd.s32 %s205, 1
      %s207 = ssub.s32 %s190, %s202
      %s208 = ssub.s32 %s194, %s206
      %s209 = sor.u32 %s207, %s208
      %p210 = scmp.eq.s32.totalorder %s209, 0
      %s212 = sadd.s32 %s211, 1
      %s213 = scalar_select %p210, %s211, %s212
      %p216 = pneg %p210
      %p217 = scmp.eq.s32.totalorder %s28, 3
      %p218 = por %p216, %p217
      %p219 = scmp.ne.s32.totalorder %s211, %s214
      %p220 = scmp.eq.s32.totalorder %s28, 0
      %p221 = por %p219, %p220
      %p222 = scmp.ne.s32.totalorder %s211, %s214
      %p223 = scmp.eq.s32.totalorder %s33, 3
      %p224 = por %p222, %p223
      %p225 = scmp.ne.s32.totalorder %s214, %s215
      %p226 = scmp.eq.s32.totalorder %s33, 0
      %p227 = por %p225, %p226
      %p228 = scmp.ne.s32.totalorder %s214, %s215
      %p229 = scmp.eq.s32.totalorder %s34, 3
      %p230 = por %p228, %p229
      %p232 = scmp.ne.s32.totalorder %s215, %s231
      %p233 = scmp.eq.s32.totalorder %s34, 0
      %p234 = por %p232, %p233
      %s235 = sshra.s32 %s36, 7
      %s236 = sand.u32 %s36, 127
      %s237 = sadd.s32 %s235, %s35
      %s238 = smul.u32 %s237, 128
      %s239 = sshra.s32 %s36, 7
      %s240 = sand.u32 %s36, 127
      %s241 = sadd.s32 %s238, %s240
      %s242 = sld [smem:[#allocation5 + %s241]]
      %s243 = sld [smem:[#allocation4 + %s241]]
      %p244 = scmp.gt.s32.totalorder %s243, 0
      %s245 = scalar_select %p244, %s37, 0
      %s246 = sshra.s32 %s50, 7
      %s247 = sand.u32 %s50, 127
      %s248 = sadd.s32 %s246, %s54
      %s249 = smul.u32 %s248, 128
      %s250 = sshra.s32 %s50, 7
      %s251 = sand.u32 %s50, 127
      %s252 = sadd.s32 %s249, %s251
      %s253 = sld [smem:[#allocation5 + %s252]]
      %s254 = sld [smem:[#allocation4 + %s252]]
      %p255 = scmp.gt.s32.totalorder %s254, 0
      %s256 = scalar_select %p255, %s46, 0
      %s257 = ssub.s32 %s242, %s253
      %s258 = ssub.s32 %s245, %s256
      %s259 = sor.u32 %s257, %s258
      %p260 = scmp.eq.s32.totalorder %s259, 0
      %s262 = sadd.s32 %s261, 1
      %s263 = scalar_select %p260, %s261, %s262
      %p266 = pneg %p260
      %p267 = scmp.eq.s32.totalorder %s28, 3
      %p268 = por %p266, %p267
      %p269 = scmp.ne.s32.totalorder %s261, %s264
      %p270 = scmp.eq.s32.totalorder %s28, 0
      %p271 = por %p269, %p270
      %p272 = scmp.ne.s32.totalorder %s261, %s264
      %p273 = scmp.eq.s32.totalorder %s33, 3
      %p274 = por %p272, %p273
      %p275 = scmp.ne.s32.totalorder %s264, %s265
      %p276 = scmp.eq.s32.totalorder %s33, 0
      %p277 = por %p275, %p276
      %p278 = scmp.ne.s32.totalorder %s264, %s265
      %p279 = scmp.eq.s32.totalorder %s34, 3
      %p280 = por %p278, %p279
      %p282 = scmp.ne.s32.totalorder %s265, %s281
      %p283 = scmp.eq.s32.totalorder %s34, 0
      %p284 = por %p282, %p283
      %s285 = sshra.s32 %s36, 7
      %s286 = sand.u32 %s36, 127
      %s287 = sadd.s32 %s285, %s35
      %s288 = smul.u32 %s287, 128
      %s289 = sshra.s32 %s36, 7
      %s290 = sand.u32 %s36, 127
      %s291 = sadd.s32 %s288, %s290
      %s292 = sld [smem:[#allocation5 + %s291]]
      %s293 = sld [smem:[#allocation4 + %s291]]
      %p294 = scmp.gt.s32.totalorder %s293, 0
      %s295 = scalar_select %p294, %s37, 0
      %s296 = sshra.s32 %s50, 7
      %s297 = sand.u32 %s50, 127
      %s298 = sadd.s32 %s296, %s54
      %s299 = smul.u32 %s298, 128
      %s300 = sshra.s32 %s50, 7
      %s301 = sand.u32 %s50, 127
      %s302 = sadd.s32 %s299, %s301
      %s303 = sld [smem:[#allocation5 + %s302]]
      %s304 = sld [smem:[#allocation4 + %s302]]
      %p305 = scmp.gt.s32.totalorder %s304, 0
      %s306 = scalar_select %p305, %s46, 0
      %s307 = ssub.s32 %s292, %s303
      %s308 = ssub.s32 %s295, %s306
      %s309 = sor.u32 %s307, %s308
      %p310 = scmp.eq.s32.totalorder %s309, 0
      %s312 = sadd.s32 %s311, 1
      %s313 = scalar_select %p310, %s311, %s312
      %p316 = pneg %p310
      %p317 = scmp.eq.s32.totalorder %s28, 3
      %p318 = por %p316, %p317
      %p319 = scmp.ne.s32.totalorder %s311, %s314
      %p320 = scmp.eq.s32.totalorder %s28, 0
      %p321 = por %p319, %p320
      %p322 = scmp.ne.s32.totalorder %s311, %s314
      %p323 = scmp.eq.s32.totalorder %s33, 3
      %p324 = por %p322, %p323
      %p325 = scmp.ne.s32.totalorder %s314, %s315
      %p326 = scmp.eq.s32.totalorder %s33, 0
      %p327 = por %p325, %p326
      %p328 = scmp.ne.s32.totalorder %s314, %s315
      %p329 = scmp.eq.s32.totalorder %s34, 3
      %p330 = por %p328, %p329
      %p332 = scmp.ne.s32.totalorder %s315, %s331
      %p333 = scmp.eq.s32.totalorder %s34, 0
      %p334 = por %p332, %p333
      %s335 = sshra.s32 %s36, 7
      %s336 = sand.u32 %s36, 127
      %s337 = sadd.s32 %s335, %s35
      %s338 = smul.u32 %s337, 128
      %s339 = sshra.s32 %s36, 7
      %s340 = sand.u32 %s36, 127
      %s341 = sadd.s32 %s338, %s340
      %s342 = sld [smem:[#allocation5 + %s341]]
      %s343 = sld [smem:[#allocation4 + %s341]]
      %p344 = scmp.gt.s32.totalorder %s343, 0
      %s345 = scalar_select %p344, %s37, 0
      %s346 = sadd.s32 %s345, 1
      %s347 = sshra.s32 %s50, 7
      %s348 = sand.u32 %s50, 127
      %s349 = sadd.s32 %s347, %s54
      %s350 = smul.u32 %s349, 128
      %s351 = sshra.s32 %s50, 7
      %s352 = sand.u32 %s50, 127
      %s353 = sadd.s32 %s350, %s352
      %s354 = sld [smem:[#allocation5 + %s353]]
      %s355 = sld [smem:[#allocation4 + %s353]]
      %p356 = scmp.gt.s32.totalorder %s355, 0
      %s357 = scalar_select %p356, %s46, 0
      %s358 = sadd.s32 %s357, 1
      %s359 = ssub.s32 %s342, %s354
      %s360 = ssub.s32 %s346, %s358
      %s361 = sor.u32 %s359, %s360
      %p362 = scmp.eq.s32.totalorder %s361, 0
      %s364 = sadd.s32 %s363, 1
      %s365 = scalar_select %p362, %s363, %s364
      %p368 = pneg %p362
      %p369 = scmp.eq.s32.totalorder %s28, 3
      %p370 = por %p368, %p369
      %p371 = scmp.ne.s32.totalorder %s363, %s366
      %p372 = scmp.eq.s32.totalorder %s28, 0
      %p373 = por %p371, %p372
      %p374 = scmp.ne.s32.totalorder %s363, %s366
      %p375 = scmp.eq.s32.totalorder %s33, 3
      %p376 = por %p374, %p375
      %p377 = scmp.ne.s32.totalorder %s366, %s367
      %p378 = scmp.eq.s32.totalorder %s33, 0
      %p379 = por %p377, %p378
      %p380 = scmp.ne.s32.totalorder %s366, %s367
      %p381 = scmp.eq.s32.totalorder %s34, 3
      %p382 = por %p380, %p381
      %p384 = scmp.ne.s32.totalorder %s367, %s383
      %p385 = scmp.eq.s32.totalorder %s34, 0
      %p386 = por %p384, %p385
      %s387 = sshra.s32 %s36, 7
      %s388 = sand.u32 %s36, 127
      %s389 = sadd.s32 %s387, %s35
      %s390 = smul.u32 %s389, 128
      %s391 = sshra.s32 %s36, 7
      %s392 = sand.u32 %s36, 127
      %s393 = sadd.s32 %s390, %s392
      %s394 = sld [smem:[#allocation5 + %s393]]
      %s395 = sld [smem:[#allocation4 + %s393]]
      %p396 = scmp.gt.s32.totalorder %s395, 0
      %s397 = scalar_select %p396, %s37, 0
      %s398 = sshra.s32 %s50, 7
      %s399 = sand.u32 %s50, 127
      %s400 = sadd.s32 %s398, %s54
      %s401 = smul.u32 %s400, 128
      %s402 = sshra.s32 %s50, 7
      %s403 = sand.u32 %s50, 127
      %s404 = sadd.s32 %s401, %s403
      %s405 = sld [smem:[#allocation5 + %s404]]
      %s406 = sld [smem:[#allocation4 + %s404]]
      %p407 = scmp.gt.s32.totalorder %s406, 0
      %s408 = scalar_select %p407, %s46, 0
      %s409 = ssub.s32 %s394, %s405
      %s410 = ssub.s32 %s397, %s408
      %s411 = sor.u32 %s409, %s410
      %p412 = scmp.eq.s32.totalorder %s411, 0
      %s414 = sadd.s32 %s413, 1
      %s415 = scalar_select %p412, %s413, %s414
      %p418 = pneg %p412
      %p419 = scmp.eq.s32.totalorder %s28, 3
      %p420 = por %p418, %p419
      %p421 = scmp.ne.s32.totalorder %s413, %s416
      %p422 = scmp.eq.s32.totalorder %s28, 0
      %p423 = por %p421, %p422
      %p424 = scmp.ne.s32.totalorder %s413, %s416
      %p425 = scmp.eq.s32.totalorder %s33, 3
      %p426 = por %p424, %p425
      %p427 = scmp.ne.s32.totalorder %s416, %s417
      %p428 = scmp.eq.s32.totalorder %s33, 0
      %p429 = por %p427, %p428
      %p430 = scmp.ne.s32.totalorder %s416, %s417
      %p431 = scmp.eq.s32.totalorder %s34, 3
      %p432 = por %p430, %p431
      %p434 = scmp.ne.s32.totalorder %s417, %s433
      %p435 = scmp.eq.s32.totalorder %s34, 0
      %p436 = por %p434, %p435
      %s437 = ssub.s32 %s35, %s54
      %p438 = scmp.eq.s32.totalorder %s437, 0
      %s440 = sadd.s32 %s439, 1
      %s441 = scalar_select %p438, %s439, %s440
      %p444 = pneg %p438
      %p445 = scmp.eq.s32.totalorder %s28, 3
      %p446 = por %p444, %p445
      %p447 = scmp.ne.s32.totalorder %s439, %s442
      %p448 = scmp.eq.s32.totalorder %s28, 0
      %p449 = por %p447, %p448
      %p450 = scmp.ne.s32.totalorder %s439, %s442
      %p451 = scmp.eq.s32.totalorder %s33, 3
      %p452 = por %p450, %p451
      %p453 = scmp.ne.s32.totalorder %s442, %s443
      %p454 = scmp.eq.s32.totalorder %s33, 0
      %p455 = por %p453, %p454
      %p456 = scmp.ne.s32.totalorder %s442, %s443
      %p457 = scmp.eq.s32.totalorder %s34, 3
      %p458 = por %p456, %p457
      %p460 = scmp.ne.s32.totalorder %s443, %s459
      %p461 = scmp.eq.s32.totalorder %s34, 0
      %p462 = por %p460, %p461
      %p463 = scmp.le.s32.totalorder 1, %s28
      %p464 = scmp.lt.s32.totalorder %s28, 5
      %p465 = pnand %p463, %p464
      %p466 = pneg %p465
      // Predicated region
      $region9: #{tpu_custom_call.1} parent=5 // pred_check
        _
      $region10: #{tpu_custom_call.1} parent=5 // pred_check_branch
        %468 = sbr.rel (%p465) target = $region12
      $region11: #{tpu_custom_call.1} parent=5 // pred_region
        %s469 = ssub.s32 %s28, 1
        // Predicated region
        $region13: #{tpu_custom_call.1} parent=11 // pred_check
          %p470 = pneg %p73
        $region14: #{tpu_custom_call.1} parent=11 // pred_check_branch
          %472 = sbr.rel (%p470) target = $region16
        $region15: #{tpu_custom_call.1} parent=11 // pred_region
          %p473 = scmp.lt.s32.totalorder %s38, 0
          %s474 = scalar_select %p473, %s38, 0
          %s475 = smul.addr %s474, 8
          %s476 = scalar_lea.vmem %s2, %s475
        $region16: #{tpu_custom_call.1} parent=11 // pred_fallthru
          _
        // Predicated region
        $region17: #{tpu_custom_call.1} parent=11 // pred_check
          %p477 = pneg %p99
        $region18: #{tpu_custom_call.1} parent=11 // pred_check_branch
          %479 = sbr.rel (%p477) target = $region20
        $region19: #{tpu_custom_call.1} parent=11 // pred_region
          %p480 = scmp.lt.s32.totalorder %s38, 0
          %s481 = scalar_select %p480, %s38, 0
          %s482 = smul.addr %s481, 8
          %s483 = scalar_lea.vmem %s3, %s482
        $region20: #{tpu_custom_call.1} parent=11 // pred_fallthru
          _
        // Predicated region
        $region21: #{tpu_custom_call.1} parent=11 // pred_check
          %p484 = pneg %p125
        $region22: #{tpu_custom_call.1} parent=11 // pred_check_branch
          %486 = sbr.rel (%p484) target = $region24
        $region23: #{tpu_custom_call.1} parent=11 // pred_region
          %p487 = scmp.lt.s32.totalorder %s38, 0
          %s488 = scalar_select %p487, %s38, 0
          %s489 = smul.addr %s488, 4
          %s490 = scalar_lea.vmem %s4, %s489
        $region24: #{tpu_custom_call.1} parent=11 // pred_fallthru
          _
      $region12: #{tpu_custom_call.1} parent=5 // pred_fallthru
        _
      %p491 = scmp.lt.s32.totalorder %s28, 4
      // Predicated region
      $region25: #{tpu_custom_call.1} parent=5 // pred_check
        %p492 = pneg %p491
      $region26: #{tpu_custom_call.1} parent=5 // pred_check_branch
        %494 = sbr.rel (%p492) target = $region28
      $region27: #{tpu_custom_call.1} parent=5 // pred_region
        // Predicated region
        $region29: #{tpu_custom_call.1} parent=27 // pred_check
          %p495 = pneg %p169
        $region30: #{tpu_custom_call.1} parent=27 // pred_check_branch
          %497 = sbr.rel (%p495) target = $region32
        $region31: #{tpu_custom_call.1} parent=27 // pred_region
          %s498 = sshra.s32 %s36, 7
          %s499 = sand.u32 %s36, 127
          %s500 = sadd.s32 %s498, %s35
          %s501 = smul.u32 %s500, 128
          %s502 = sshra.s32 %s36, 7
          %s503 = sand.u32 %s36, 127
          %s504 = sadd.s32 %s501, %s503
          %s505 = sld [smem:[#allocation5 + %s504]]
          %s506 = sld [smem:[#allocation4 + %s504]]
          %p507 = scmp.gt.s32.totalorder %s506, 0
          %s508 = scalar_select %p507, %s37, 0
          %s509 = smul.u32 2, %s508
          %p510 = scmp.lt.s32.totalorder %s505, 3
          %s511 = scalar_select %p510, %s505, 3
          %p512 = scmp.lt.s32.totalorder %s509, 3
          %s513 = scalar_select %p512, %s509, 3
          %s514 = smul.addr %s511, 4
          %s515 = sadd.s32 %s513, %s514
          %s516 = smul.addr %s515, 8
          %s517 = scalar_lea.vmem %s5, %s516
          %s518 = sshra.s32 %s36, 7
          %s519 = sand.u32 %s36, 127
          %s520 = sadd.s32 %s518, %s35
          %s521 = smul.u32 %s520, 128
          %s522 = sshra.s32 %s36, 7
          %s523 = sand.u32 %s36, 127
          %s524 = sadd.s32 %s521, %s523
          %s525 = sld [smem:[#allocation5 + %s524]]
          %s526 = sld [smem:[#allocation4 + %s524]]
          %p527 = scmp.gt.s32.totalorder %s526, 0
          %s528 = scalar_select %p527, %s37, 0
          %s529 = smul.u32 2, %s528
        $region32: #{tpu_custom_call.1} parent=27 // pred_fallthru
          _
        // Predicated region
        $region33: #{tpu_custom_call.1} parent=27 // pred_check
          %p530 = pneg %p221
        $region34: #{tpu_custom_call.1} parent=27 // pred_check_branch
          %532 = sbr.rel (%p530) target = $region36
        $region35: #{tpu_custom_call.1} parent=27 // pred_region
          %s533 = sshra.s32 %s36, 7
          %s534 = sand.u32 %s36, 127
          %s535 = sadd.s32 %s533, %s35
          %s536 = smul.u32 %s535, 128
          %s537 = sshra.s32 %s36, 7
          %s538 = sand.u32 %s36, 127
          %s539 = sadd.s32 %s536, %s538
          %s540 = sld [smem:[#allocation5 + %s539]]
          %s541 = sld [smem:[#allocation4 + %s539]]
          %p542 = scmp.gt.s32.totalorder %s541, 0
          %s543 = scalar_select %p542, %s37, 0
          %s544 = sadd.s32 %s543, 1
          %s545 = smul.u32 2, %s544
          %p546 = scmp.lt.s32.totalorder %s540, 3
          %s547 = scalar_select %p546, %s540, 3
          %p548 = scmp.lt.s32.totalorder %s545, 3
          %s549 = scalar_select %p548, %s545, 3
          %s550 = smul.addr %s547, 4
          %s551 = sadd.s32 %s549, %s550
          %s552 = smul.addr %s551, 8
          %s553 = scalar_lea.vmem %s6, %s552
          %s554 = sshra.s32 %s36, 7
          %s555 = sand.u32 %s36, 127
          %s556 = sadd.s32 %s554, %s35
          %s557 = smul.u32 %s556, 128
          %s558 = sshra.s32 %s36, 7
          %s559 = sand.u32 %s36, 127
          %s560 = sadd.s32 %s557, %s559
          %s561 = sld [smem:[#allocation5 + %s560]]
          %s562 = sld [smem:[#allocation4 + %s560]]
          %p563 = scmp.gt.s32.totalorder %s562, 0
          %s564 = scalar_select %p563, %s37, 0
          %s565 = sadd.s32 %s564, 1
          %s566 = smul.u32 2, %s565
        $region36: #{tpu_custom_call.1} parent=27 // pred_fallthru
          _
        // Predicated region
        $region37: #{tpu_custom_call.1} parent=27 // pred_check
          %p567 = pneg %p271
        $region38: #{tpu_custom_call.1} parent=27 // pred_check_branch
          %569 = sbr.rel (%p567) target = $region40
        $region39: #{tpu_custom_call.1} parent=27 // pred_region
          %s570 = sshra.s32 %s36, 7
          %s571 = sand.u32 %s36, 127
          %s572 = sadd.s32 %s570, %s35
          %s573 = smul.u32 %s572, 128
          %s574 = sshra.s32 %s36, 7
          %s575 = sand.u32 %s36, 127
          %s576 = sadd.s32 %s573, %s575
          %s577 = sld [smem:[#allocation5 + %s576]]
          %s578 = sld [smem:[#allocation4 + %s576]]
          %p579 = scmp.gt.s32.totalorder %s578, 0
          %s580 = scalar_select %p579, %s37, 0
          %p581 = scmp.lt.s32.totalorder %s577, 3
          %s582 = scalar_select %p581, %s577, 3
          %p583 = scmp.lt.s32.totalorder %s580, 0
          %s584 = scalar_select %p583, %s580, 0
          %s585 = sadd.s32 %s584, %s582
          %s586 = smul.addr %s585, 8
          %s587 = scalar_lea.vmem %s7, %s586
          %s588 = sshra.s32 %s36, 7
          %s589 = sand.u32 %s36, 127
          %s590 = sadd.s32 %s588, %s35
          %s591 = smul.u32 %s590, 128
          %s592 = sshra.s32 %s36, 7
          %s593 = sand.u32 %s36, 127
          %s594 = sadd.s32 %s591, %s593
          %s595 = sld [smem:[#allocation5 + %s594]]
          %s596 = sld [smem:[#allocation4 + %s594]]
          %p597 = scmp.gt.s32.totalorder %s596, 0
          %s598 = scalar_select %p597, %s37, 0
        $region40: #{tpu_custom_call.1} parent=27 // pred_fallthru
          _
        // Predicated region
        $region41: #{tpu_custom_call.1} parent=27 // pred_check
          %p599 = pneg %p321
        $region42: #{tpu_custom_call.1} parent=27 // pred_check_branch
          %601 = sbr.rel (%p599) target = $region44
        $region43: #{tpu_custom_call.1} parent=27 // pred_region
          %s602 = sshra.s32 %s36, 7
          %s603 = sand.u32 %s36, 127
          %s604 = sadd.s32 %s602, %s35
          %s605 = smul.u32 %s604, 128
          %s606 = sshra.s32 %s36, 7
          %s607 = sand.u32 %s36, 127
          %s608 = sadd.s32 %s605, %s607
          %s609 = sld [smem:[#allocation5 + %s608]]
          %s610 = sld [smem:[#allocation4 + %s608]]
          %p611 = scmp.gt.s32.totalorder %s610, 0
          %s612 = scalar_select %p611, %s37, 0
          %p613 = scmp.lt.s32.totalorder %s609, 3
          %s614 = scalar_select %p613, %s609, 3
          %p615 = scmp.lt.s32.totalorder %s612, 1
          %s616 = scalar_select %p615, %s612, 1
          %s617 = smul.addr %s614, 2
          %s618 = sadd.s32 %s616, %s617
          %s619 = smul.addr %s618, 2
          %s620 = scalar_lea.vmem %s8, %s619
          %s621 = sshra.s32 %s36, 7
          %s622 = sand.u32 %s36, 127
          %s623 = sadd.s32 %s621, %s35
          %s624 = smul.u32 %s623, 128
          %s625 = sshra.s32 %s36, 7
          %s626 = sand.u32 %s36, 127
          %s627 = sadd.s32 %s624, %s626
          %s628 = sld [smem:[#allocation5 + %s627]]
          %s629 = sld [smem:[#allocation4 + %s627]]
          %p630 = scmp.gt.s32.totalorder %s629, 0
          %s631 = scalar_select %p630, %s37, 0
        $region44: #{tpu_custom_call.1} parent=27 // pred_fallthru
          _
        // Predicated region
        $region45: #{tpu_custom_call.1} parent=27 // pred_check
          %p632 = pneg %p373
        $region46: #{tpu_custom_call.1} parent=27 // pred_check_branch
          %634 = sbr.rel (%p632) target = $region48
        $region47: #{tpu_custom_call.1} parent=27 // pred_region
          %s635 = sshra.s32 %s36, 7
          %s636 = sand.u32 %s36, 127
          %s637 = sadd.s32 %s635, %s35
          %s638 = smul.u32 %s637, 128
          %s639 = sshra.s32 %s36, 7
          %s640 = sand.u32 %s36, 127
          %s641 = sadd.s32 %s638, %s640
          %s642 = sld [smem:[#allocation5 + %s641]]
          %s643 = sld [smem:[#allocation4 + %s641]]
          %p644 = scmp.gt.s32.totalorder %s643, 0
          %s645 = scalar_select %p644, %s37, 0
          %s646 = sadd.s32 %s645, 1
          %p647 = scmp.lt.s32.totalorder %s642, 3
          %s648 = scalar_select %p647, %s642, 3
          %p649 = scmp.lt.s32.totalorder %s646, 1
          %s650 = scalar_select %p649, %s646, 1
          %s651 = smul.addr %s648, 2
          %s652 = sadd.s32 %s650, %s651
          %s653 = smul.addr %s652, 2
          %s654 = scalar_lea.vmem %s9, %s653
          %s655 = sshra.s32 %s36, 7
          %s656 = sand.u32 %s36, 127
          %s657 = sadd.s32 %s655, %s35
          %s658 = smul.u32 %s657, 128
          %s659 = sshra.s32 %s36, 7
          %s660 = sand.u32 %s36, 127
          %s661 = sadd.s32 %s658, %s660
          %s662 = sld [smem:[#allocation5 + %s661]]
          %s663 = sld [smem:[#allocation4 + %s661]]
          %p664 = scmp.gt.s32.totalorder %s663, 0
          %s665 = scalar_select %p664, %s37, 0
          %s666 = sadd.s32 %s665, 1
        $region48: #{tpu_custom_call.1} parent=27 // pred_fallthru
          _
        // Predicated region
        $region49: #{tpu_custom_call.1} parent=27 // pred_check
          %p667 = pneg %p423
        $region50: #{tpu_custom_call.1} parent=27 // pred_check_branch
          %669 = sbr.rel (%p667) target = $region52
        $region51: #{tpu_custom_call.1} parent=27 // pred_region
          %s670 = sshra.s32 %s36, 7
          %s671 = sand.u32 %s36, 127
          %s672 = sadd.s32 %s670, %s35
          %s673 = smul.u32 %s672, 128
          %s674 = sshra.s32 %s36, 7
          %s675 = sand.u32 %s36, 127
          %s676 = sadd.s32 %s673, %s675
          %s677 = sld [smem:[#allocation5 + %s676]]
          %s678 = sld [smem:[#allocation4 + %s676]]
          %p679 = scmp.gt.s32.totalorder %s678, 0
          %s680 = scalar_select %p679, %s37, 0
          %p681 = scmp.lt.s32.totalorder %s677, 3
          %s682 = scalar_select %p681, %s677, 3
          %p683 = scmp.lt.s32.totalorder %s680, 0
          %s684 = scalar_select %p683, %s680, 0
          %s685 = sadd.s32 %s684, %s682
          %s686 = scalar_lea.vmem %s10, %s685
          %s687 = sshra.s32 %s36, 7
          %s688 = sand.u32 %s36, 127
          %s689 = sadd.s32 %s687, %s35
          %s690 = smul.u32 %s689, 128
          %s691 = sshra.s32 %s36, 7
          %s692 = sand.u32 %s36, 127
          %s693 = sadd.s32 %s690, %s692
          %s694 = sld [smem:[#allocation5 + %s693]]
          %s695 = sld [smem:[#allocation4 + %s693]]
          %p696 = scmp.gt.s32.totalorder %s695, 0
          %s697 = scalar_select %p696, %s37, 0
        $region52: #{tpu_custom_call.1} parent=27 // pred_fallthru
          _
      $region28: #{tpu_custom_call.1} parent=5 // pred_fallthru
        _
      %p698 = scmp.le.s32.totalorder 1, %s28
      %p699 = scmp.lt.s32.totalorder %s28, 5
      %p700 = pnand %p698, %p699
      %p701 = pneg %p700
      // Predicated region
      $region53: #{tpu_custom_call.1} parent=5 // pred_check
        _
      $region54: #{tpu_custom_call.1} parent=5 // pred_check_branch
        %703 = sbr.rel (%p700) target = $region56
      $region55: #{tpu_custom_call.1} parent=5 // pred_region
        %s704 = ssub.s32 %s28, 1
        %p705 = scmp.lt.s32.totalorder %s38, 0
        %s706 = scalar_select %p705, %s38, 0
        %s707 = smul.addr %s706, 8
        %s708 = scalar_lea.vmem %s2, %s707
        %p709 = pneg %p73
        %p710 = pneg %p70
        %p711 = scmp.lt.s32.totalorder %s38, 0
        %s712 = scalar_select %p711, %s38, 0
        %s713 = smul.addr %s712, 8
        %s714 = scalar_lea.vmem %s3, %s713
        %p715 = pneg %p99
        %p716 = pneg %p96
        %p717 = scmp.lt.s32.totalorder %s38, 0
        %s718 = scalar_select %p717, %s38, 0
        %s719 = smul.addr %s718, 4
        %s720 = scalar_lea.vmem %s4, %s719
        %p721 = pneg %p125
        %p722 = pneg %p122
        %s723 = sshra.s32 %s39, 7
        %s724 = sand.u32 %s39, 127
        %s725 = sadd.s32 %s723, %s38
        %s726 = smul.u32 %s725, 128
        %s727 = sshra.s32 %s39, 7
        %s728 = sand.u32 %s39, 127
        %s729 = sadd.s32 %s726, %s728
        %s730 = sld [smem:[#allocation5 + %s729]]
        %s731 = sld [smem:[#allocation4 + %s729]]
        %p732 = scmp.gt.s32.totalorder %s731, 0
        %s733 = scalar_select %p732, %s40, 0
        %s734 = smul.u32 2, %s733
        %p735 = scmp.lt.s32.totalorder %s730, 3
        %s736 = scalar_select %p735, %s730, 3
        %p737 = scmp.lt.s32.totalorder %s734, 3
        %s738 = scalar_select %p737, %s734, 3
        %s739 = smul.addr %s736, 4
        %s740 = sadd.s32 %s738, %s739
        %s741 = smul.addr %s740, 8
        %s742 = scalar_lea.vmem %s5, %s741
        %p743 = pneg %p175
        %p744 = pneg %p172
        %s745 = sshra.s32 %s39, 7
        %s746 = sand.u32 %s39, 127
        %s747 = sadd.s32 %s745, %s38
        %s748 = smul.u32 %s747, 128
        %s749 = sshra.s32 %s39, 7
        %s750 = sand.u32 %s39, 127
        %s751 = sadd.s32 %s748, %s750
        %s752 = sld [smem:[#allocation5 + %s751]]
        %s753 = sld [smem:[#allocation4 + %s751]]
        %p754 = scmp.gt.s32.totalorder %s753, 0
        %s755 = scalar_select %p754, %s40, 0
        %s756 = sadd.s32 %s755, 1
        %s757 = smul.u32 2, %s756
        %p758 = scmp.lt.s32.totalorder %s752, 3
        %s759 = scalar_select %p758, %s752, 3
        %p760 = scmp.lt.s32.totalorder %s757, 3
        %s761 = scalar_select %p760, %s757, 3
        %s762 = smul.addr %s759, 4
        %s763 = sadd.s32 %s761, %s762
        %s764 = smul.addr %s763, 8
        %s765 = scalar_lea.vmem %s6, %s764
        %p766 = pneg %p227
        %p767 = pneg %p224
        %s768 = sshra.s32 %s39, 7
        %s769 = sand.u32 %s39, 127
        %s770 = sadd.s32 %s768, %s38
        %s771 = smul.u32 %s770, 128
        %s772 = sshra.s32 %s39, 7
        %s773 = sand.u32 %s39, 127
        %s774 = sadd.s32 %s771, %s773
        %s775 = sld [smem:[#allocation5 + %s774]]
        %s776 = sld [smem:[#allocation4 + %s774]]
        %p777 = scmp.gt.s32.totalorder %s776, 0
        %s778 = scalar_select %p777, %s40, 0
        %p779 = scmp.lt.s32.totalorder %s775, 3
        %s780 = scalar_select %p779, %s775, 3
        %p781 = scmp.lt.s32.totalorder %s778, 0
        %s782 = scalar_select %p781, %s778, 0
        %s783 = sadd.s32 %s782, %s780
        %s784 = smul.addr %s783, 8
        %s785 = scalar_lea.vmem %s7, %s784
        %p786 = pneg %p277
        %p787 = pneg %p274
        %s788 = sshra.s32 %s39, 7
        %s789 = sand.u32 %s39, 127
        %s790 = sadd.s32 %s788, %s38
        %s791 = smul.u32 %s790, 128
        %s792 = sshra.s32 %s39, 7
        %s793 = sand.u32 %s39, 127
        %s794 = sadd.s32 %s791, %s793
        %s795 = sld [smem:[#allocation5 + %s794]]
        %s796 = sld [smem:[#allocation4 + %s794]]
        %p797 = scmp.gt.s32.totalorder %s796, 0
        %s798 = scalar_select %p797, %s40, 0
        %p799 = scmp.lt.s32.totalorder %s795, 3
        %s800 = scalar_select %p799, %s795, 3
        %p801 = scmp.lt.s32.totalorder %s798, 1
        %s802 = scalar_select %p801, %s798, 1
        %s803 = smul.addr %s800, 2
        %s804 = sadd.s32 %s802, %s803
        %s805 = smul.addr %s804, 2
        %s806 = scalar_lea.vmem %s8, %s805
        %p807 = pneg %p327
        %p808 = pneg %p324
        %s809 = sshra.s32 %s39, 7
        %s810 = sand.u32 %s39, 127
        %s811 = sadd.s32 %s809, %s38
        %s812 = smul.u32 %s811, 128
        %s813 = sshra.s32 %s39, 7
        %s814 = sand.u32 %s39, 127
        %s815 = sadd.s32 %s812, %s814
        %s816 = sld [smem:[#allocation5 + %s815]]
        %s817 = sld [smem:[#allocation4 + %s815]]
        %p818 = scmp.gt.s32.totalorder %s817, 0
        %s819 = scalar_select %p818, %s40, 0
        %s820 = sadd.s32 %s819, 1
        %p821 = scmp.lt.s32.totalorder %s816, 3
        %s822 = scalar_select %p821, %s816, 3
        %p823 = scmp.lt.s32.totalorder %s820, 1
        %s824 = scalar_select %p823, %s820, 1
        %s825 = smul.addr %s822, 2
        %s826 = sadd.s32 %s824, %s825
        %s827 = smul.addr %s826, 2
        %s828 = scalar_lea.vmem %s9, %s827
        %p829 = pneg %p379
        %p830 = pneg %p376
        %s831 = sshra.s32 %s39, 7
        %s832 = sand.u32 %s39, 127
        %s833 = sadd.s32 %s831, %s38
        %s834 = smul.u32 %s833, 128
        %s835 = sshra.s32 %s39, 7
        %s836 = sand.u32 %s39, 127
        %s837 = sadd.s32 %s834, %s836
        %s838 = sld [smem:[#allocation5 + %s837]]
        %s839 = sld [smem:[#allocation4 + %s837]]
        %p840 = scmp.gt.s32.totalorder %s839, 0
        %s841 = scalar_select %p840, %s40, 0
        %p842 = scmp.lt.s32.totalorder %s838, 3
        %s843 = scalar_select %p842, %s838, 3
        %p844 = scmp.lt.s32.totalorder %s841, 0
        %s845 = scalar_select %p844, %s841, 0
        %s846 = sadd.s32 %s845, %s843
        %s847 = scalar_lea.vmem %s10, %s846
        %p848 = pneg %p429
        %p849 = pneg %p426
        %p850 = pneg %p455
        %p851 = pneg %p452
        %p852 = scmp.lt.s32.totalorder %s38, 0
        %s853 = scalar_select %p852, %s38, 0
        %s854 = smul.addr %s853, 8
        %s855 = scalar_lea.vmem %s2, %s854
        %p856 = scmp.lt.s32.totalorder %s38, 0
        %s857 = scalar_select %p856, %s38, 0
        %s858 = smul.addr %s857, 8
        %s859 = scalar_lea.vmem %s3, %s858
        %p860 = scmp.lt.s32.totalorder %s38, 0
        %s861 = scalar_select %p860, %s38, 0
        %s862 = smul.addr %s861, 4
        %s863 = scalar_lea.vmem %s4, %s862
        %s864 = sshra.s32 %s39, 7
        %s865 = sand.u32 %s39, 127
        %s866 = sadd.s32 %s864, %s38
        %s867 = smul.u32 %s866, 128
        %s868 = sshra.s32 %s39, 7
        %s869 = sand.u32 %s39, 127
        %s870 = sadd.s32 %s867, %s869
        %s871 = sld [smem:[#allocation5 + %s870]]
        %s872 = sld [smem:[#allocation4 + %s870]]
        %p873 = scmp.gt.s32.totalorder %s872, 0
        %s874 = scalar_select %p873, %s40, 0
        %s875 = smul.u32 2, %s874
        %p876 = scmp.lt.s32.totalorder %s871, 3
        %s877 = scalar_select %p876, %s871, 3
        %p878 = scmp.lt.s32.totalorder %s875, 3
        %s879 = scalar_select %p878, %s875, 3
        %s880 = smul.addr %s877, 4
        %s881 = sadd.s32 %s879, %s880
        %s882 = smul.addr %s881, 8
        %s883 = scalar_lea.vmem %s5, %s882
        %s884 = sshra.s32 %s39, 7
        %s885 = sand.u32 %s39, 127
        %s886 = sadd.s32 %s884, %s38
        %s887 = smul.u32 %s886, 128
        %s888 = sshra.s32 %s39, 7
        %s889 = sand.u32 %s39, 127
        %s890 = sadd.s32 %s887, %s889
        %s891 = sld [smem:[#allocation5 + %s890]]
        %s892 = sld [smem:[#allocation4 + %s890]]
        %p893 = scmp.gt.s32.totalorder %s892, 0
        %s894 = scalar_select %p893, %s40, 0
        %s895 = smul.u32 2, %s894
        %s896 = sshra.s32 %s39, 7
        %s897 = sand.u32 %s39, 127
        %s898 = sadd.s32 %s896, %s38
        %s899 = smul.u32 %s898, 128
        %s900 = sshra.s32 %s39, 7
        %s901 = sand.u32 %s39, 127
        %s902 = sadd.s32 %s899, %s901
        %s903 = sld [smem:[#allocation5 + %s902]]
        %s904 = sld [smem:[#allocation4 + %s902]]
        %p905 = scmp.gt.s32.totalorder %s904, 0
        %s906 = scalar_select %p905, %s40, 0
        %s907 = sadd.s32 %s906, 1
        %s908 = smul.u32 2, %s907
        %p909 = scmp.lt.s32.totalorder %s903, 3
        %s910 = scalar_select %p909, %s903, 3
        %p911 = scmp.lt.s32.totalorder %s908, 3
        %s912 = scalar_select %p911, %s908, 3
        %s913 = smul.addr %s910, 4
        %s914 = sadd.s32 %s912, %s913
        %s915 = smul.addr %s914, 8
        %s916 = scalar_lea.vmem %s6, %s915
        %s917 = sshra.s32 %s39, 7
        %s918 = sand.u32 %s39, 127
        %s919 = sadd.s32 %s917, %s38
        %s920 = smul.u32 %s919, 128
        %s921 = sshra.s32 %s39, 7
        %s922 = sand.u32 %s39, 127
        %s923 = sadd.s32 %s920, %s922
        %s924 = sld [smem:[#allocation5 + %s923]]
        %s925 = sld [smem:[#allocation4 + %s923]]
        %p926 = scmp.gt.s32.totalorder %s925, 0
        %s927 = scalar_select %p926, %s40, 0
        %s928 = sadd.s32 %s927, 1
        %s929 = smul.u32 2, %s928
        %s930 = sshra.s32 %s39, 7
        %s931 = sand.u32 %s39, 127
        %s932 = sadd.s32 %s930, %s38
        %s933 = smul.u32 %s932, 128
        %s934 = sshra.s32 %s39, 7
        %s935 = sand.u32 %s39, 127
        %s936 = sadd.s32 %s933, %s935
        %s937 = sld [smem:[#allocation5 + %s936]]
        %s938 = sld [smem:[#allocation4 + %s936]]
        %p939 = scmp.gt.s32.totalorder %s938, 0
        %s940 = scalar_select %p939, %s40, 0
        %p941 = scmp.lt.s32.totalorder %s937, 3
        %s942 = scalar_select %p941, %s937, 3
        %p943 = scmp.lt.s32.totalorder %s940, 0
        %s944 = scalar_select %p943, %s940, 0
        %s945 = sadd.s32 %s944, %s942
        %s946 = smul.addr %s945, 8
        %s947 = scalar_lea.vmem %s7, %s946
        %s948 = sshra.s32 %s39, 7
        %s949 = sand.u32 %s39, 127
        %s950 = sadd.s32 %s948, %s38
        %s951 = smul.u32 %s950, 128
        %s952 = sshra.s32 %s39, 7
        %s953 = sand.u32 %s39, 127
        %s954 = sadd.s32 %s951, %s953
        %s955 = sld [smem:[#allocation5 + %s954]]
        %s956 = sld [smem:[#allocation4 + %s954]]
        %p957 = scmp.gt.s32.totalorder %s956, 0
        %s958 = scalar_select %p957, %s40, 0
        %s959 = sshra.s32 %s39, 7
        %s960 = sand.u32 %s39, 127
        %s961 = sadd.s32 %s959, %s38
        %s962 = smul.u32 %s961, 128
        %s963 = sshra.s32 %s39, 7
        %s964 = sand.u32 %s39, 127
        %s965 = sadd.s32 %s962, %s964
        %s966 = sld [smem:[#allocation5 + %s965]]
        %s967 = sld [smem:[#allocation4 + %s965]]
        %p968 = scmp.gt.s32.totalorder %s967, 0
        %s969 = scalar_select %p968, %s40, 0
        %p970 = scmp.lt.s32.totalorder %s966, 3
        %s971 = scalar_select %p970, %s966, 3
        %p972 = scmp.lt.s32.totalorder %s969, 1
        %s973 = scalar_select %p972, %s969, 1
        %s974 = smul.addr %s971, 2
        %s975 = sadd.s32 %s973, %s974
        %s976 = smul.addr %s975, 2
        %s977 = scalar_lea.vmem %s8, %s976
        %s978 = sshra.s32 %s39, 7
        %s979 = sand.u32 %s39, 127
        %s980 = sadd.s32 %s978, %s38
        %s981 = smul.u32 %s980, 128
        %s982 = sshra.s32 %s39, 7
        %s983 = sand.u32 %s39, 127
        %s984 = sadd.s32 %s981, %s983
        %s985 = sld [smem:[#allocation5 + %s984]]
        %s986 = sld [smem:[#allocation4 + %s984]]
        %p987 = scmp.gt.s32.totalorder %s986, 0
        %s988 = scalar_select %p987, %s40, 0
        %s989 = sshra.s32 %s39, 7
        %s990 = sand.u32 %s39, 127
        %s991 = sadd.s32 %s989, %s38
        %s992 = smul.u32 %s991, 128
        %s993 = sshra.s32 %s39, 7
        %s994 = sand.u32 %s39, 127
        %s995 = sadd.s32 %s992, %s994
        %s996 = sld [smem:[#allocation5 + %s995]]
        %s997 = sld [smem:[#allocation4 + %s995]]
        %p998 = scmp.gt.s32.totalorder %s997, 0
        %s999 = scalar_select %p998, %s40, 0
        %s1000 = sadd.s32 %s999, 1
        %p1001 = scmp.lt.s32.totalorder %s996, 3
        %s1002 = scalar_select %p1001, %s996, 3
        %p1003 = scmp.lt.s32.totalorder %s1000, 1
        %s1004 = scalar_select %p1003, %s1000, 1
        %s1005 = smul.addr %s1002, 2
        %s1006 = sadd.s32 %s1004, %s1005
        %s1007 = smul.addr %s1006, 2
        %s1008 = scalar_lea.vmem %s9, %s1007
        %s1009 = sshra.s32 %s39, 7
        %s1010 = sand.u32 %s39, 127
        %s1011 = sadd.s32 %s1009, %s38
        %s1012 = smul.u32 %s1011, 128
        %s1013 = sshra.s32 %s39, 7
        %s1014 = sand.u32 %s39, 127
        %s1015 = sadd.s32 %s1012, %s1014
        %s1016 = sld [smem:[#allocation5 + %s1015]]
        %s1017 = sld [smem:[#allocation4 + %s1015]]
        %p1018 = scmp.gt.s32.totalorder %s1017, 0
        %s1019 = scalar_select %p1018, %s40, 0
        %s1020 = sadd.s32 %s1019, 1
        %s1021 = sshra.s32 %s39, 7
        %s1022 = sand.u32 %s39, 127
        %s1023 = sadd.s32 %s1021, %s38
        %s1024 = smul.u32 %s1023, 128
        %s1025 = sshra.s32 %s39, 7
        %s1026 = sand.u32 %s39, 127
        %s1027 = sadd.s32 %s1024, %s1026
        %s1028 = sld [smem:[#allocation5 + %s1027]]
        %s1029 = sld [smem:[#allocation4 + %s1027]]
        %p1030 = scmp.gt.s32.totalorder %s1029, 0
        %s1031 = scalar_select %p1030, %s40, 0
        %p1032 = scmp.lt.s32.totalorder %s1028, 3
        %s1033 = scalar_select %p1032, %s1028, 3
        %p1034 = scmp.lt.s32.totalorder %s1031, 0
        %s1035 = scalar_select %p1034, %s1031, 0
        %s1036 = sadd.s32 %s1035, %s1033
        %s1037 = scalar_lea.vmem %s10, %s1036
        %s1038 = sshra.s32 %s39, 7
        %s1039 = sand.u32 %s39, 127
        %s1040 = sadd.s32 %s1038, %s38
        %s1041 = smul.u32 %s1040, 128
        %s1042 = sshra.s32 %s39, 7
        %s1043 = sand.u32 %s39, 127
        %s1044 = sadd.s32 %s1041, %s1043
        %s1045 = sld [smem:[#allocation5 + %s1044]]
        %s1046 = sld [smem:[#allocation4 + %s1044]]
        %p1047 = scmp.gt.s32.totalorder %s1046, 0
        %s1048 = scalar_select %p1047, %s40, 0
        %p1050 = scmp.eq.s32.totalorder %s39, 0
        %p1051 = scmp.eq.s32.totalorder %s40, 0
        %p1052 = pnand %p1050, %p1051
        %p1053 = pneg %p1052
        // Predicated region
        $region57: #{tpu_custom_call.1} parent=55 // pred_check
          _
        $region58: #{tpu_custom_call.1} parent=55 // pred_check_branch
          %1055 = sbr.rel (%p1052) target = $region60
        $region59: #{tpu_custom_call.1} parent=55 // pred_region
          %vm1056 = vcmask 261120
          %1057 = vst.msk [vmem:[#allocation2] sm:$0xff] %vm1056, 0.0
        $region60: #{tpu_custom_call.1} parent=55 // pred_fallthru
          _
        %s1058 = sshra.s32 %s39, 7
        %s1059 = sand.u32 %s39, 127
        %s1060 = sadd.s32 %s1058, %s38
        %s1061 = smul.u32 %s1060, 128
        %s1062 = sshra.s32 %s39, 7
        %s1063 = sand.u32 %s39, 127
        %s1064 = sadd.s32 %s1061, %s1063
        %s1065 = sld [smem:[#allocation4 + %s1064]]
        %p1066 = scmp.gt.s32.totalorder %s1065, 0
        // Predicated region
        $region61: #{tpu_custom_call.1} parent=55 // pred_check
          %p1067 = pneg %p1066
        $region62: #{tpu_custom_call.1} parent=55 // pred_check_branch
          %1069 = sbr.rel (%p1067) target = $region64
        $region63: #{tpu_custom_call.1} parent=55 // pred_region
          %v1070 = vld [vmem:[%s855] sm:$0xff]
          %v1071 = vld [vmem:[%s859] sm:$0xff]
          %v1072 = vstv %s39
          %vm1073 = vcmp.eq.s32.totalorder %v1070, %v1072
          %v1074 = vsel %vm1073, %v1071, 0.0
          %vm1075 = vcmask 15360
          %v1076 = vsel %vm1075, %v1074, 0.0
          %1077 = vadd.xlane.f32.xlu0 %v1076
          %v1078 = vpop.xlane.xlu0 %1077
          %v1079 = vld [vmem:[%s863] sm:$0xf]
          %v1080 = vld [vmem:[%s883] sm:$0xff]
          %v1081 = vld [vmem:[%s883 + $0x8] sm:$0xff]
          %v1082 = vunpack.c.l.f8e4m3fn %v1080
          %v1083 = vunpack.c.h.f8e4m3fn %v1080
          %v1084 = vunpack.c.l.f8e4m3fn %v1081
          %v1085 = vunpack.c.h.f8e4m3fn %v1081
          %v1086 = vld [vmem:[%s977] sm:$0x3]
          %v1089 = vunpack.c.l.s4 1966171168
          %v1090 = vunpack.c.0.s8 %v1089
          %v1091 = vlaneseq
          %v1092 = vshrl.u32 %v1091, 7
          %v1093 = vsub.s32 %v1090, %v1092
          %v1094 = vrot.slane %v1086, %v1093
          %v1095 = vcombine.high %v1094, %v1094
          %v1096 = vunpack.i.l.s16 %v1094
          %v1097 = vunpack.i.h.s16 %v1094
          %v1098 = vunpack.i.l.s16 %v1095
          %v1099 = vunpack.i.h.s16 %v1095
          %v1100 = vpack.i.b16 %v1096, %v1096
          %v1101 = vpack.i.b16 %v1097, %v1097
          %v1102 = vpack.i.b16 %v1098, %v1098
          %v1103 = vpack.i.b16 %v1099, %v1099
          %v1104 = vlaneseq
          %v1105 = vshrl.u32 %v1104, 7
          %v1106 = vsub.s32 0, %v1105
          %v1107 = vrot.slane %v1100, %v1106
          %v1108 = vlaneseq
          %v1109 = vshrl.u32 %v1108, 7
          %v1110 = vsub.s32 0, %v1109
          %v1111 = vrot.slane %v1101, %v1110
          %v1112 = vlaneseq
          %v1113 = vshrl.u32 %v1112, 7
          %v1114 = vsub.s32 0, %v1113
          %v1115 = vrot.slane %v1102, %v1114
          %v1116 = vlaneseq
          %v1117 = vshrl.u32 %v1116, 7
          %v1118 = vsub.s32 0, %v1117
          %v1119 = vrot.slane %v1103, %v1118
          %v1121 = vpack.i.b16 %v1107, %v1107
          %v1123 = vlaneseq
          %v1124 = vshrl.u32 %v1123, 7
          %v1125 = vsub.s32 0, %v1124
          %v1126 = vrot.slane %v1121, %v1125
          %v1128 = vpack.i.b16 %v1111, %v1111
          %v1130 = vlaneseq
          %v1131 = vshrl.u32 %v1130, 7
          %v1132 = vsub.s32 0, %v1131
          %v1133 = vrot.slane %v1128, %v1132
          %v1135 = vpack.i.b16 %v1115, %v1115
          %v1137 = vlaneseq
          %v1138 = vshrl.u32 %v1137, 7
          %v1139 = vsub.s32 0, %v1138
          %v1140 = vrot.slane %v1135, %v1139
          %v1142 = vpack.i.b16 %v1119, %v1119
          %v1144 = vlaneseq
          %v1145 = vshrl.u32 %v1144, 7
          %v1146 = vsub.s32 0, %v1145
          %v1147 = vrot.slane %v1142, %v1146
          %v1148 = vmul.bf16 %v1082, %v1126
          %v1149 = vmul.bf16 %v1083, %v1133
          %v1150 = vmul.bf16 %v1084, %v1140
          %v1151 = vmul.bf16 %v1085, %v1147
          %v1152 = vld [vmem:[%s916] sm:$0xff]
          %v1153 = vld [vmem:[%s916 + $0x8] sm:$0xff]
          %v1154 = vunpack.c.l.f8e4m3fn %v1152
          %v1155 = vunpack.c.h.f8e4m3fn %v1152
          %v1156 = vunpack.c.l.f8e4m3fn %v1153
          %v1157 = vunpack.c.h.f8e4m3fn %v1153
          %v1158 = vld [vmem:[%s1008] sm:$0x3]
          %v1161 = vunpack.c.l.s4 1966171168
          %v1162 = vunpack.c.0.s8 %v1161
          %v1163 = vlaneseq
          %v1164 = vshrl.u32 %v1163, 7
          %v1165 = vsub.s32 %v1162, %v1164
          %v1166 = vrot.slane %v1158, %v1165
          %v1167 = vcombine.high %v1166, %v1166
          %v1168 = vunpack.i.l.s16 %v1166
          %v1169 = vunpack.i.h.s16 %v1166
          %v1170 = vunpack.i.l.s16 %v1167
          %v1171 = vunpack.i.h.s16 %v1167
          %v1172 = vpack.i.b16 %v1168, %v1168
          %v1173 = vpack.i.b16 %v1169, %v1169
          %v1174 = vpack.i.b16 %v1170, %v1170
          %v1175 = vpack.i.b16 %v1171, %v1171
          %v1176 = vlaneseq
          %v1177 = vshrl.u32 %v1176, 7
          %v1178 = vsub.s32 0, %v1177
          %v1179 = vrot.slane %v1172, %v1178
          %v1180 = vlaneseq
          %v1181 = vshrl.u32 %v1180, 7
          %v1182 = vsub.s32 0, %v1181
          %v1183 = vrot.slane %v1173, %v1182
          %v1184 = vlaneseq
          %v1185 = vshrl.u32 %v1184, 7
          %v1186 = vsub.s32 0, %v1185
          %v1187 = vrot.slane %v1174, %v1186
          %v1188 = vlaneseq
          %v1189 = vshrl.u32 %v1188, 7
          %v1190 = vsub.s32 0, %v1189
          %v1191 = vrot.slane %v1175, %v1190
          %v1193 = vpack.i.b16 %v1179, %v1179
          %v1195 = vlaneseq
          %v1196 = vshrl.u32 %v1195, 7
          %v1197 = vsub.s32 0, %v1196
          %v1198 = vrot.slane %v1193, %v1197
          %v1200 = vpack.i.b16 %v1183, %v1183
          %v1202 = vlaneseq
          %v1203 = vshrl.u32 %v1202, 7
          %v1204 = vsub.s32 0, %v1203
          %v1205 = vrot.slane %v1200, %v1204
          %v1207 = vpack.i.b16 %v1187, %v1187
          %v1209 = vlaneseq
          %v1210 = vshrl.u32 %v1209, 7
          %v1211 = vsub.s32 0, %v1210
          %v1212 = vrot.slane %v1207, %v1211
          %v1214 = vpack.i.b16 %v1191, %v1191
          %v1216 = vlaneseq
          %v1217 = vshrl.u32 %v1216, 7
          %v1218 = vsub.s32 0, %v1217
          %v1219 = vrot.slane %v1214, %v1218
          %v1220 = vmul.bf16 %v1154, %v1198
          %v1221 = vmul.bf16 %v1155, %v1205
          %v1222 = vmul.bf16 %v1156, %v1212
          %v1223 = vmul.bf16 %v1157, %v1219
          %v1224 = vld [vmem:[%s947] sm:$0xff]
          %v1225 = vunpack.c.l.f8e4m3fn %v1224
          %v1226 = vunpack.c.h.f8e4m3fn %v1224
          %v1227 = vld [vmem:[%s1037] sm:$0x1]
          %v1229 = vunpack.i.l.s16 %v1227
          %v1230 = vunpack.i.h.s16 %v1227
          %v1231 = vpack.i.b16 %v1229, %v1229
          %v1232 = vpack.i.b16 %v1230, %v1230
          %v1233 = vlaneseq
          %v1234 = vshrl.u32 %v1233, 7
          %v1235 = vsub.s32 0, %v1234
          %v1236 = vrot.slane %v1231, %v1235
          %v1237 = vlaneseq
          %v1238 = vshrl.u32 %v1237, 7
          %v1239 = vsub.s32 0, %v1238
          %v1240 = vrot.slane %v1232, %v1239
          %v1242 = vpack.i.b16 %v1236, %v1236
          %v1244 = vlaneseq
          %v1245 = vshrl.u32 %v1244, 7
          %v1246 = vsub.s32 0, %v1245
          %v1247 = vrot.slane %v1242, %v1246
          %v1249 = vpack.i.b16 %v1240, %v1240
          %v1251 = vlaneseq
          %v1252 = vshrl.u32 %v1251, 7
          %v1253 = vsub.s32 0, %v1252
          %v1254 = vrot.slane %v1249, %v1253
          %v1255 = vmul.bf16 %v1225, %v1247
          %v1256 = vmul.bf16 %v1226, %v1254
          %vm1257 = vcmask 261120
          %v1259 = vsel %vm1257, %v1079, 0
          %v1262 = vsel %vm1257, %v1148, 0
          %v1265 = vsel %vm1257, %v1149, 0
          %v1268 = vsel %vm1257, %v1150, 0
          %v1271 = vsel %vm1257, %v1151, 0
          %1273 = vmatprep.subr.bf16.mxu0 0
          %1274 = vmatpush1.bf16.xpose.msra.mxu0 %v1262
          %1275 = vmatprep.subr.bf16.mxu0 0
          %1276 = vmatpush1.bf16.xpose.msra.mxu0 %v1265
          %1277 = vmatprep.subr.bf16.mxu0 0
          %1278 = vmatpush1.bf16.xpose.msra.mxu0 %v1268
          %1279 = vmatprep.subr.bf16.mxu0 0
          %1280 = vmatpush1.bf16.xpose.msra.mxu0 %v1271
          %1281 = vmatprep.subr.bf16.mxu0 0
          %1282 = vmatpush1.bf16.xpose.msra.mxu0 0
          %1283 = vmatprep.subr.bf16.mxu0 0
          %1284 = vmatpush1.bf16.xpose.msra.mxu0 0
          %1285 = vmatprep.subr.bf16.mxu0 0
          %1286 = vmatpush1.bf16.xpose.msra.mxu0 0
          %1287 = vmatprep.subr.bf16.mxu0 0
          %1288 = vmatpush1.bf16.xpose.msra.mxu0 0
          %1289 = vmatprep.subr.bf16.mxu0 0
          %1290 = vmatpush1.bf16.xpose.msra.mxu0 0
          %1291 = vmatprep.subr.bf16.mxu0 0
          %1292 = vmatpush1.bf16.xpose.msra.mxu0 0
          %1293 = vmatprep.subr.bf16.mxu0 0
          %1294 = vmatpush1.bf16.xpose.msra.mxu0 0
          %1295 = vmatprep.subr.bf16.mxu0 0
          %1296 = vmatpush1.bf16.xpose.msra.mxu0 0
          %1297 = vmatprep.subr.bf16.mxu0 0
          %1298 = vmatpush1.bf16.xpose.msra.mxu0 0
          %1299 = vmatprep.subr.bf16.mxu0 0
          %1300 = vmatpush1.bf16.xpose.msra.mxu0 0
          %1301 = vmatprep.subr.bf16.mxu0 0
          %1302 = vmatpush1.bf16.xpose.msra.mxu0 0
          %1303 = vmatprep.subr.bf16.mxu0 0
          %1304 = vmatpush1.bf16.xpose.msra.mxu0 0
          %1305 = vmatprep.mubr.bf16.mxu0 0
          %1306 = vmatmul.mubr.bf16.gmra.mrb[0].mxu0 %v1259
          %v1307 = vpop.f32.mrb[0].mxu0
          %v1308 = vadd.f32 0.0, %v1307
          %v1309 = vpop.f32.mrb[0].mxu0
          %v1310 = vpop.f32.mrb[0].mxu0
          %v1311 = vpop.f32.mrb[0].mxu0
          %1312 = vdwg.mxu0
          %v1314 = vsel %vm1257, %v1220, 0
          %v1317 = vsel %vm1257, %v1221, 0
          %v1320 = vsel %vm1257, %v1222, 0
          %v1323 = vsel %vm1257, %v1223, 0
          %1325 = vmatprep.subr.bf16.mxu0 0
          %1326 = vmatpush1.bf16.xpose.msra.mxu0 %v1314
          %1327 = vmatprep.subr.bf16.mxu0 0
          %1328 = vmatpush1.bf16.xpose.msra.mxu0 %v1317
          %1329 = vmatprep.subr.bf16.mxu0 0
          %1330 = vmatpush1.bf16.xpose.msra.mxu0 %v1320
          %1331 = vmatprep.subr.bf16.mxu0 0
          %1332 = vmatpush1.bf16.xpose.msra.mxu0 %v1323
          %1333 = vmatprep.subr.bf16.mxu0 0
          %1334 = vmatpush1.bf16.xpose.msra.mxu0 0
          %1335 = vmatprep.subr.bf16.mxu0 0
          %1336 = vmatpush1.bf16.xpose.msra.mxu0 0
          %1337 = vmatprep.subr.bf16.mxu0 0
          %1338 = vmatpush1.bf16.xpose.msra.mxu0 0
          %1339 = vmatprep.subr.bf16.mxu0 0
          %1340 = vmatpush1.bf16.xpose.msra.mxu0 0
          %1341 = vmatprep.subr.bf16.mxu0 0
          %1342 = vmatpush1.bf16.xpose.msra.mxu0 0
          %1343 = vmatprep.subr.bf16.mxu0 0
          %1344 = vmatpush1.bf16.xpose.msra.mxu0 0
          %1345 = vmatprep.subr.bf16.mxu0 0
          %1346 = vmatpush1.bf16.xpose.msra.mxu0 0
          %1347 = vmatprep.subr.bf16.mxu0 0
          %1348 = vmatpush1.bf16.xpose.msra.mxu0 0
          %1349 = vmatprep.subr.bf16.mxu0 0
          %1350 = vmatpush1.bf16.xpose.msra.mxu0 0
          %1351 = vmatprep.subr.bf16.mxu0 0
          %1352 = vmatpush1.bf16.xpose.msra.mxu0 0
          %1353 = vmatprep.subr.bf16.mxu0 0
          %1354 = vmatpush1.bf16.xpose.msra.mxu0 0
          %1355 = vmatprep.subr.bf16.mxu0 0
          %1356 = vmatpush1.bf16.xpose.msra.mxu0 0
          %1357 = vmatprep.mubr.bf16.mxu0 0
          %1358 = vmatmul.mubr.bf16.gmra.mrb[0].mxu0 %v1259
          %v1359 = vpop.f32.mrb[0].mxu0
          %v1360 = vadd.f32 0.0, %v1359
          %v1361 = vpop.f32.mrb[0].mxu0
          %v1362 = vpop.f32.mrb[0].mxu0
          %v1363 = vpop.f32.mrb[0].mxu0
          %1364 = vdwg.mxu0
          %v1365 = vsub.f32 0.0, %v1308
          %v1366 = vmul.f32 %v1365, 1.442695
          %v1367 = vpow.pop %v1366
          %v1368 = vadd.f32 %v1367, 1.0
          %v1369 = vrcp.pop %v1368
          %v1370 = vmul.f32 %v1308, %v1369
          %v1371 = vmul.f32 %v1370, %v1360
          %v1372 = vmul.f32 %v1371, %v1078
          %v1373 = vpack.c.bf16 %v1372, %v1372
          %v1374 = vld [vmem:[#allocation2] sm:$0xff]
          %vm1375 = vcmask 523264
          %v1377 = vsel %vm1375, %v1373, 0
          %v1380 = vsel %vm1375, %v1255, 0
          %v1383 = vsel %vm1375, %v1256, 0
          %1385 = vmatprep.subr.bf16.mxu0 0
          %1386 = vmatpush1.bf16.xpose.msra.mxu0 %v1380
          %1387 = vmatprep.subr.bf16.mxu0 0
          %1388 = vmatpush1.bf16.xpose.msra.mxu0 %v1383
          %1389 = vmatprep.subr.bf16.mxu0 0
          %1390 = vmatpush1.bf16.xpose.msra.mxu0 0
          %1391 = vmatprep.subr.bf16.mxu0 0
          %1392 = vmatpush1.bf16.xpose.msra.mxu0 0
          %1393 = vmatprep.subr.bf16.mxu0 0
          %1394 = vmatpush1.bf16.xpose.msra.mxu0 0
          %1395 = vmatprep.subr.bf16.mxu0 0
          %1396 = vmatpush1.bf16.xpose.msra.mxu0 0
          %1397 = vmatprep.subr.bf16.mxu0 0
          %1398 = vmatpush1.bf16.xpose.msra.mxu0 0
          %1399 = vmatprep.subr.bf16.mxu0 0
          %1400 = vmatpush1.bf16.xpose.msra.mxu0 0
          %1401 = vmatprep.subr.bf16.mxu0 0
          %1402 = vmatpush1.bf16.xpose.msra.mxu0 0
          %1403 = vmatprep.subr.bf16.mxu0 0
          %1404 = vmatpush1.bf16.xpose.msra.mxu0 0
          %1405 = vmatprep.subr.bf16.mxu0 0
          %1406 = vmatpush1.bf16.xpose.msra.mxu0 0
          %1407 = vmatprep.subr.bf16.mxu0 0
          %1408 = vmatpush1.bf16.xpose.msra.mxu0 0
          %1409 = vmatprep.subr.bf16.mxu0 0
          %1410 = vmatpush1.bf16.xpose.msra.mxu0 0
          %1411 = vmatprep.subr.bf16.mxu0 0
          %1412 = vmatpush1.bf16.xpose.msra.mxu0 0
          %1413 = vmatprep.subr.bf16.mxu0 0
          %1414 = vmatpush1.bf16.xpose.msra.mxu0 0
          %1415 = vmatprep.subr.bf16.mxu0 0
          %1416 = vmatpush1.bf16.xpose.msra.mxu0 0
          %1417 = vmatprep.mubr.bf16.mxu0 0
          %1418 = vmatmul.mubr.bf16.gmra.mrb[0].mxu0 %v1377
          %v1419 = vpop.f32.mrb[0].mxu0
          %v1420 = vadd.f32 0.0, %v1419
          %v1421 = vpop.f32.mrb[0].mxu0
          %v1422 = vpop.f32.mrb[0].mxu0
          %v1423 = vpop.f32.mrb[0].mxu0
          %1424 = vdwg.mxu0
          %v1425 = vadd.f32 %v1374, %v1420
          %1426 = vst.msk [vmem:[#allocation2] sm:$0xff] %vm1257, %v1425
        $region64: #{tpu_custom_call.1} parent=55 // pred_fallthru
          _
        %p1427 = scmp.eq.s32.totalorder %s39, 3
        %p1428 = pnand %p1427, %p1051
        %p1429 = pneg %p1428
        // Predicated region
        $region65: #{tpu_custom_call.1} parent=55 // pred_check
          _
        $region66: #{tpu_custom_call.1} parent=55 // pred_check_branch
          %1431 = sbr.rel (%p1428) target = $region68
        $region67: #{tpu_custom_call.1} parent=55 // pred_region
          %v1432 = vld [vmem:[#allocation2] sm:$0xff]
          %v1433 = vpack.c.bf16 %v1432, %v1432
          %vm1434 = vcmask 257024
          %1435 = vst.msk [vmem:[#allocation6] sm:$0xf] %vm1434, %v1433
        $region68: #{tpu_custom_call.1} parent=55 // pred_fallthru
          _
        // Predicated region
        $region69: #{tpu_custom_call.1} parent=55 // pred_check
          %p1436 = pneg %p452
        $region70: #{tpu_custom_call.1} parent=55 // pred_check_branch
          %1438 = sbr.rel (%p1436) target = $region72
        $region71: #{tpu_custom_call.1} parent=55 // pred_region
          %s1440 = ssub.s32 64, 64
          %1441 = vsyncadd [#allocation7], %s1440
          %s1442 = smul.addr %s38, 64
          %s1443 = scalar_lea.hbm %s11, %s1442
          %s1445 = sshll.u32 [#allocation6], 4
          %s1446 = int_to_ptr.vmem [resolvable:$true] %s1445
          %1448 = dma.vmem_to_hbm [thread:$0]  %s1446, 64, %s1443, [#allocation7]
        $region72: #{tpu_custom_call.1} parent=55 // pred_fallthru
          _
        // Predicated region
        $region73: #{tpu_custom_call.1} parent=55 // pred_check
          %p1449 = pneg %p452
        $region74: #{tpu_custom_call.1} parent=55 // pred_check_branch
          %1451 = sbr.rel (%p1449) target = $region76
        $region75: #{tpu_custom_call.1} parent=55 // pred_region
          %1452 = dma.done [#allocation7], 64
        $region76: #{tpu_custom_call.1} parent=55 // pred_fallthru
          _
      $region56: #{tpu_custom_call.1} parent=5 // pred_fallthru
        _
      %p1453 = scmp.le.s32.totalorder 2, %s28
      // Predicated region
      $region77: #{tpu_custom_call.1} parent=5 // pred_check
        %p1454 = pneg %p1453
      $region78: #{tpu_custom_call.1} parent=5 // pred_check_branch
        %1456 = sbr.rel (%p1454) target = $region80
      $region79: #{tpu_custom_call.1} parent=5 // pred_region
        %s1457 = ssub.s32 %s28, 2
      $region80: #{tpu_custom_call.1} parent=5 // pred_fallthru
        _
    $region6: #{tpu_custom_call.1} parent=1 // loop_footer
      %s32 = sadd.s32 1, %s28
    $region7: #{tpu_custom_call.1} parent=1 // loop_footer_branch
      %27 = sbr.rel target = $region3
    $region8: #{tpu_custom_call.1} parent=1 // loop_exit
      _
    %1458 = vsyncpa [#allocation7], 1
    %s1459 = scalar_lea.sflag [#allocation7], 1
    %1460 = vsyncpa %s1459, 1

</llo_original>
